<compile_context>
chip_gen: v6e
topology: v6e:2x2x1
jax: 0.10.0
libtpu: 0.0.40
codegen_flags: <defaults>
</compile_context>

<pallas_src>
import functools
import math

import jax
import jax.numpy as jnp
from jax.experimental import pallas as pl
from jax.experimental.pallas import tpu as pltpu


# Finite "-inf": keeps the online-softmax recurrence NaN-free.
_MASK_VALUE = -1e30


def _pick_tile(dim, pref, align):
    """Largest tile <= pref that divides `dim` and is a multiple of `align`;
    falls back to the full dim (full-extent blocks are always legal)."""
    if dim <= pref:
        return dim
    t = (pref // align) * align
    while t >= align:
        if dim % t == 0:
            return t
        t -= align
    return dim


# ---------------------------------------------------------------------------
# Kernel 1: multi-head flash attention (online softmax over KV tiles)
# ---------------------------------------------------------------------------
def _flash_attn_kernel(q_ref, k_ref, v_ref, mask_ref, o_ref,
                       m_sc, l_sc, acc_sc, *, scale):
    """One (batch, q-tile, kv-tile) grid step.

    Block shapes:
      q_ref    (1, H, Tq, Dh)
      k_ref    (1, H, Tkv, Dh)
      v_ref    (1, H, Tkv, Dh)
      mask_ref (1, Hm, Tq, Tkv)   additive f32, Hm in {1, H}
      o_ref    (1, Tq, H, Dh)     written only on the last kv step
      scratch  m_sc / l_sc (H, Tq, 1), acc_sc (H, Tq, Dh), all f32
    """
    kv_idx = pl.program_id(2)

    @pl.when(kv_idx == 0)
    def _init():
        m_sc[...] = jnp.full(m_sc.shape, _MASK_VALUE, m_sc.dtype)
        l_sc[...] = jnp.zeros(l_sc.shape, l_sc.dtype)
        acc_sc[...] = jnp.zeros(acc_sc.shape, acc_sc.dtype)

    q = q_ref[0]          # (H, Tq, Dh)
    k = k_ref[0]          # (H, Tkv, Dh)
    v = v_ref[0]          # (H, Tkv, Dh)
    mask = mask_ref[0]    # (Hm, Tq, Tkv)

    # QK^T: batched over heads, contracting Dh -- no transpose materialized.
    s = jax.lax.dot_general(
        q, k,
        dimension_numbers=(((2,), (2,)), ((0,), (0,))),
        preferred_element_type=jnp.float32)          # (H, Tq, Tkv)
    s = s * scale + mask                             # mask broadcasts over H if Hm == 1

    m_prev = m_sc[...]                               # (H, Tq, 1)
    m_new = jnp.maximum(m_prev, jnp.max(s, axis=-1, keepdims=True))
    alpha = jnp.exp(m_prev - m_new)
    p = jnp.exp(s - m_new)                           # (H, Tq, Tkv)

    l_sc[...] = alpha * l_sc[...] + jnp.sum(p, axis=-1, keepdims=True)
    pv = jax.lax.dot_general(
        p.astype(v.dtype), v,
        dimension_numbers=(((2,), (1,)), ((0,), (0,))),
        preferred_element_type=jnp.float32)          # (H, Tq, Dh)
    acc_sc[...] = alpha * acc_sc[...] + pv
    m_sc[...] = m_new

    @pl.when(kv_idx == pl.num_programs(2) - 1)
    def _finalize():
        num_heads = acc_sc.shape[0]
        inv_l = pl.reciprocal(l_sc[...], approx=True)    # (H, Tq, 1)  EUP slot
        # Write the q-tile in (Tq, H, Dh) layout so the flattened (H*Dh) axis
        # is already the linear layer's input layout.
        for h in range(num_heads):                       # static unroll, small H
            o_ref[0, :, h, :] = (acc_sc[h] * inv_l[h]).astype(o_ref.dtype)


def _attention_pallas(q, k, v, mask_f, d_model):
    B, H, S, Dh = q.shape
    scale = 1.0 / math.sqrt(d_model)   # module scales by sqrt(d_model), not sqrt(Dh)
    Bm, Hm = mask_f.shape[0], mask_f.shape[1]

    Tq = _pick_tile(S, 128, 8)
    Tkv = _pick_tile(S, 256, 128)
    grid = (B, S // Tq, S // Tkv)

    q_spec = pl.BlockSpec((1, H, Tq, Dh), lambda b, qi, ki: (b, 0, qi, 0))
    kv_spec = pl.BlockSpec((1, H, Tkv, Dh), lambda b, qi, ki: (b, 0, ki, 0))
    # Broadcast size-1 batch dim of the mask through the index_map (no
    # materialized (B,H,S,S) mask in HBM).
    mask_spec = pl.BlockSpec(
        (1, Hm, Tq, Tkv),
        lambda b, qi, ki: (b if Bm > 1 else 0, 0, qi, ki))
    out_spec = pl.BlockSpec((1, Tq, H, Dh), lambda b, qi, ki: (b, qi, 0, 0))

    itemsize = q.dtype.itemsize
    cost = pl.CostEstimate(
        flops=4 * B * H * S * S * Dh,
        transcendentals=B * H * S * S,
        bytes_accessed=(4 * B * H * S * Dh) * itemsize + Bm * Hm * S * S * 4,
    )

    return pl.pallas_call(
        functools.partial(_flash_attn_kernel, scale=scale),
        out_shape=jax.ShapeDtypeStruct((B, S, H, Dh), q.dtype),
        grid_spec=pltpu.PrefetchScalarGridSpec(
            num_scalar_prefetch=0,
            grid=grid,
            in_specs=[q_spec, kv_spec, kv_spec, mask_spec],
            out_specs=out_spec,
            scratch_shapes=[
                pltpu.VMEM((H, Tq, 1), jnp.float32),    # running max
                pltpu.VMEM((H, Tq, 1), jnp.float32),    # running denom
                pltpu.VMEM((H, Tq, Dh), jnp.float32),   # running numerator
            ],
        ),
        compiler_params=pltpu.CompilerParams(
            dimension_semantics=("parallel", "parallel", "arbitrary"),
        ),
        cost_estimate=cost,
    )(q, k, v, mask_f)


# ---------------------------------------------------------------------------
# Kernel 2: row-tiled output Linear  y = x @ W^T + b  (PyTorch nn.Linear)
# ---------------------------------------------------------------------------
def _linear_kernel(x_ref, w_ref, b_ref, o_ref):
    y = jax.lax.dot_general(
        x_ref[...], w_ref[...],
        dimension_numbers=(((1,), (1,)), ((), ())),   # contract last dims: x @ W^T
        preferred_element_type=jnp.float32)
    o_ref[...] = (y + b_ref[...]).astype(o_ref.dtype)


def _linear_pallas(x2d, weight, bias):
    N, d_in = x2d.shape
    d_out = weight.shape[0]
    Tn = _pick_tile(N, 256, 8)

    cost = pl.CostEstimate(
        flops=2 * N * d_in * d_out,
        transcendentals=0,
        bytes_accessed=(N * d_in + N * d_out) * x2d.dtype.itemsize
        + (d_out * d_in + d_out) * weight.dtype.itemsize,
    )

    return pl.pallas_call(
        _linear_kernel,
        out_shape=jax.ShapeDtypeStruct((N, d_out), x2d.dtype),
        grid_spec=pltpu.PrefetchScalarGridSpec(
            num_scalar_prefetch=0,
            grid=(N // Tn,),
            in_specs=[
                pl.BlockSpec((Tn, d_in), lambda i: (i, 0)),
                pl.BlockSpec((d_out, d_in), lambda i: (0, 0)),   # weight stays resident
                pl.BlockSpec((1, d_out), lambda i: (0, 0)),
            ],
            out_specs=pl.BlockSpec((Tn, d_out), lambda i: (i, 0)),
        ),
        compiler_params=pltpu.CompilerParams(
            dimension_semantics=("parallel",),
        ),
        cost_estimate=cost,
    )(x2d, weight, bias.reshape(1, d_out))


# ---------------------------------------------------------------------------
# Module-equivalent wrapper
# ---------------------------------------------------------------------------
def _permute_fc_weight(fc_weight, num_heads, head_dim):
    """Fold PyTorch's permute(0,2,3,1).view flatten (column index dh*H + h)
    into the weight, so the kernel can use the natural (h, dh) flatten
    (column index h*Dh + dh).  One-time host-side op."""
    d_model = num_heads * head_dim
    w = fc_weight.reshape(d_model, head_dim, num_heads)           # [o, dh, h]
    return jnp.transpose(w, (0, 2, 1)).reshape(d_model, d_model)  # [o, h*Dh + dh]


def scaled_dot_product_attention(q, k, v, mask, fc_weight, fc_bias, d_model):
    """Equivalent of ScaledDotProductAttention.forward."""
    B, H, S, Dh = q.shape
    assert H * Dh == d_model

    # Normalize the mask to an additive float mask without materializing the
    # (B, H, S, S) broadcast (batch/head broadcast happens in the BlockSpec).
    if mask is None:
        mask_f = jnp.zeros((1, 1, S, S), jnp.float32)
    elif mask.dtype == jnp.bool_:
        mask_f = jnp.where(mask, 0.0, _MASK_VALUE).astype(jnp.float32)
    else:
        # Clamp so the online softmax stays finite.
        # TODO(synk): rows that are fully masked yield uniform attention here,
        # whereas PyTorch softmax of an all -inf row yields NaN.
        mask_f = jnp.maximum(mask.astype(jnp.float32), _MASK_VALUE)
    assert mask_f.shape[0] in (1, B) and mask_f.shape[1] in (1, H)
    mask_f = jnp.broadcast_to(
        mask_f, (mask_f.shape[0], mask_f.shape[1], S, S))  # only q/k dims

    attn = _attention_pallas(q, k, v, mask_f, d_model)     # (B, S, H, Dh)
    attn = attn.reshape(B, S, d_model)                     # free reshape

    w_perm = _permute_fc_weight(fc_weight, H, Dh)          # one-time host op
    y = _linear_pallas(attn.reshape(B * S, d_model), w_perm, fc_bias)
    return y.reshape(B, S, d_model)


# Pure-JAX reference (faithful to the PyTorch module) for a sanity check.
def _reference(q, k, v, mask, fc_weight, fc_bias, d_model):
    score = jnp.einsum("bhqd,bhkd->bhqk", q, k) / math.sqrt(d_model)
    if mask is not None:
        if mask.dtype == jnp.bool_:
            score = jnp.where(mask, score, -jnp.inf)
        else:
            score = score + mask
    p = jax.nn.softmax(score, axis=-1)
    attn = jnp.einsum("bhqk,bhkd->bhqd", p, v)
    B, H, S, Dh = q.shape
    attn = jnp.transpose(attn, (0, 2, 3, 1)).reshape(B, S, d_model)
    return attn @ fc_weight.T + fc_bias


if __name__ == "__main__":
    B, H, S, Dh = 2, 4, 8, 8
    d_model = H * Dh  # 32

    key = jax.random.PRNGKey(0)
    kq, kk, kv_, kw, kb = jax.random.split(key, 5)

    q = jax.random.normal(kq, (B, H, S, Dh), dtype=jnp.float32)
    k = jax.random.normal(kk, (B, H, S, Dh), dtype=jnp.float32)
    v = jax.random.normal(kv_, (B, H, S, Dh), dtype=jnp.float32)

    # Broadcastable causal bool mask (1,1,S,S) — exercises the
    # no-materialization path and the bool branch of the module.
    mask = jnp.tril(jnp.ones((S, S), dtype=jnp.bool_))[None, None, :, :]

    # Deterministic nn.Linear(d_model, d_model) parameters.
    bound = 1.0 / math.sqrt(d_model)
    fc_weight = jax.random.uniform(kw, (d_model, d_model), jnp.float32, -bound, bound)
    fc_bias = jax.random.uniform(kb, (d_model,), jnp.float32, -bound, bound)

    out = scaled_dot_product_attention(q, k, v, mask, fc_weight, fc_bias, d_model)
    out = jax.block_until_ready(out)

    ref = _reference(q, k, v, mask, fc_weight, fc_bias, d_model)
    assert out.shape == (B, S, d_model)
    # Tolerance accounts for the approx (EUP) reciprocal in the softmax epilogue.
    assert jnp.allclose(out, ref, atol=2e-2, rtol=2e-2), "Pallas result mismatch"

    print("KERNEL_OK")
</pallas_src>

<mosaic_0001>
module attributes {stable_mosaic.version = 11 : i64} {
  func.func @_flash_attn_kernel(%arg0: i32, %arg1: i32, %arg2: i32, %arg3: memref<1x4x8x8xf32, #tpu.memory_space<vmem>>, %arg4: memref<1x4x8x8xf32, #tpu.memory_space<vmem>>, %arg5: memref<1x4x8x8xf32, #tpu.memory_space<vmem>>, %arg6: memref<1x1x8x8xf32, #tpu.memory_space<vmem>>, %arg7: memref<1x8x4x8xf32, #tpu.memory_space<vmem>>, %arg8: memref<4x8x1xf32, #tpu.memory_space<vmem>>, %arg9: memref<4x8x1xf32, #tpu.memory_space<vmem>>, %arg10: memref<4x8x8xf32, #tpu.memory_space<vmem>>) attributes {dimension_semantics = [#tpu.dimension_semantics<parallel>, #tpu.dimension_semantics<parallel>, #tpu.dimension_semantics<arbitrary>], iteration_bounds = array<i64: 2, 1, 1>, scalar_prefetch = 0 : i64, scratch_operands = 3 : i64, tpu.core_type = #tpu.core_type<tc>, window_params = [{transform_indices = @transform_0, window_bounds = array<i64: 1, 4, 8, 8>}, {transform_indices = @transform_1, window_bounds = array<i64: 1, 4, 8, 8>}, {transform_indices = @transform_2, window_bounds = array<i64: 1, 4, 8, 8>}, {transform_indices = @transform_3, window_bounds = array<i64: 1, 1, 8, 8>}, {transform_indices = @transform_4, window_bounds = array<i64: 1, 8, 4, 8>}]} {
    %c0_i32 = arith.constant 0 : i32
    %0 = arith.cmpi eq, %arg2, %c0_i32 : i32
    %1 = arith.extui %0 : i1 to i32
    %c0_i32_0 = arith.constant 0 : i32
    %2 = arith.cmpi ne, %1, %c0_i32_0 : i32
    scf.if %2 {
      %cst_40 = arith.constant -1.000000e+30 : f32
      %41 = vector.broadcast %cst_40 : f32 to vector<4x8x1xf32>
      %c0_41 = arith.constant 0 : index
      %c0_42 = arith.constant 0 : index
      %c0_43 = arith.constant 0 : index
      %42 = vector.load %arg8[%c0_41, %c0_42, %c0_43] : memref<4x8x1xf32, #tpu.memory_space<vmem>>, vector<4x8x1xf32>
      tpu.vector_store %arg8[%c0_41, %c0_42, %c0_43], %41 {strides = array<i32>} : memref<4x8x1xf32, #tpu.memory_space<vmem>>, vector<4x8x1xf32>,
      %cst_44 = arith.constant 0.000000e+00 : f32
      %43 = vector.broadcast %cst_44 : f32 to vector<4x8x1xf32>
      %c0_45 = arith.constant 0 : index
      %c0_46 = arith.constant 0 : index
      %c0_47 = arith.constant 0 : index
      %44 = vector.load %arg9[%c0_45, %c0_46, %c0_47] : memref<4x8x1xf32, #tpu.memory_space<vmem>>, vector<4x8x1xf32>
      tpu.vector_store %arg9[%c0_45, %c0_46, %c0_47], %43 {strides = array<i32>} : memref<4x8x1xf32, #tpu.memory_space<vmem>>, vector<4x8x1xf32>,
      %cst_48 = arith.constant 0.000000e+00 : f32
      %45 = vector.broadcast %cst_48 : f32 to vector<4x8x8xf32>
      %c0_49 = arith.constant 0 : index
      %c0_50 = arith.constant 0 : index
      %c0_51 = arith.constant 0 : index
      %46 = vector.load %arg10[%c0_49, %c0_50, %c0_51] : memref<4x8x8xf32, #tpu.memory_space<vmem>>, vector<4x8x8xf32>
      tpu.vector_store %arg10[%c0_49, %c0_50, %c0_51], %45 {strides = array<i32>} : memref<4x8x8xf32, #tpu.memory_space<vmem>>, vector<4x8x8xf32>,
    } else {
    }
    %c0 = arith.constant 0 : index
    %c0_1 = arith.constant 0 : index
    %c0_2 = arith.constant 0 : index
    %c0_3 = arith.constant 0 : index
    %3 = vector.load %arg3[%c0, %c0_1, %c0_2, %c0_3] : memref<1x4x8x8xf32, #tpu.memory_space<vmem>>, vector<1x4x8x8xf32>
    %4 = vector.shape_cast %3 : vector<1x4x8x8xf32> to vector<4x8x8xf32>
    %c0_4 = arith.constant 0 : index
    %c0_5 = arith.constant 0 : index
    %c0_6 = arith.constant 0 : index
    %c0_7 = arith.constant 0 : index
    %5 = vector.load %arg4[%c0_4, %c0_5, %c0_6, %c0_7] : memref<1x4x8x8xf32, #tpu.memory_space<vmem>>, vector<1x4x8x8xf32>
    %6 = vector.shape_cast %5 : vector<1x4x8x8xf32> to vector<4x8x8xf32>
    %c0_8 = arith.constant 0 : index
    %c0_9 = arith.constant 0 : index
    %c0_10 = arith.constant 0 : index
    %c0_11 = arith.constant 0 : index
    %7 = vector.load %arg5[%c0_8, %c0_9, %c0_10, %c0_11] : memref<1x4x8x8xf32, #tpu.memory_space<vmem>>, vector<1x4x8x8xf32>
    %8 = vector.shape_cast %7 : vector<1x4x8x8xf32> to vector<4x8x8xf32>
    %c0_12 = arith.constant 0 : index
    %c0_13 = arith.constant 0 : index
    %c0_14 = arith.constant 0 : index
    %c0_15 = arith.constant 0 : index
    %9 = vector.load %arg6[%c0_12, %c0_13, %c0_14, %c0_15] : memref<1x1x8x8xf32, #tpu.memory_space<vmem>>, vector<1x1x8x8xf32>
    %10 = vector.shape_cast %9 : vector<1x1x8x8xf32> to vector<1x8x8xf32>
    %cst = arith.constant dense<0.000000e+00> : vector<4x8x8xf32>
    %11 = tpu.matmul %4, %6, %cst {dimension_numbers = #tpu.dot_dimension_numbers<[2], [2], [1], [1], [0, 0, 0, 1, 1, 1], [0], [0]>} : vector<4x8x8xf32>, vector<4x8x8xf32>, vector<4x8x8xf32> -> vector<4x8x8xf32>
    %cst_16 = arith.constant 0.176776692 : f32
    %12 = vector.broadcast %cst_16 : f32 to vector<4x8x8xf32>
    %13 = arith.mulf %11, %12 : vector<4x8x8xf32>
    %14 = vector.broadcast %10 : vector<1x8x8xf32> to vector<4x8x8xf32>
    %15 = arith.addf %13, %14 : vector<4x8x8xf32>
    %c0_17 = arith.constant 0 : index
    %c0_18 = arith.constant 0 : index
    %c0_19 = arith.constant 0 : index
    %16 = vector.load %arg8[%c0_17, %c0_18, %c0_19] : memref<4x8x1xf32, #tpu.memory_space<vmem>>, vector<4x8x1xf32>
    %cst_20 = arith.constant dense<0xFF800000> : vector<4x8xf32>
    %17 = vector.multi_reduction <maximumf>, %15, %cst_20 [2] : vector<4x8x8xf32> to vector<4x8xf32>
    %18 = vector.shape_cast %17 : vector<4x8xf32> to vector<4x8x1xf32>
    %19 = arith.maximumf %16, %18 : vector<4x8x1xf32>
    %20 = arith.subf %16, %19 : vector<4x8x1xf32>
    %21 = math.exp %20 : vector<4x8x1xf32>
    %22 = vector.broadcast %19 : vector<4x8x1xf32> to vector<4x8x8xf32>
    %23 = arith.subf %15, %22 : vector<4x8x8xf32>
    %24 = math.exp %23 : vector<4x8x8xf32>
    %c0_21 = arith.constant 0 : index
    %c0_22 = arith.constant 0 : index
    %c0_23 = arith.constant 0 : index
    %25 = vector.load %arg9[%c0_21, %c0_22, %c0_23] : memref<4x8x1xf32, #tpu.memory_space<vmem>>, vector<4x8x1xf32>
    %26 = arith.mulf %21, %25 : vector<4x8x1xf32>
    %cst_24 = arith.constant dense<0.000000e+00> : vector<4x8xf32>
    %27 = vector.multi_reduction <add>, %24, %cst_24 [2] : vector<4x8x8xf32> to vector<4x8xf32>
    %28 = vector.shape_cast %27 : vector<4x8xf32> to vector<4x8x1xf32>
    %29 = arith.addf %26, %28 : vector<4x8x1xf32>
    %c0_25 = arith.constant 0 : index
    %c0_26 = arith.constant 0 : index
    %c0_27 = arith.constant 0 : index
    %30 = vector.load %arg9[%c0_25, %c0_26, %c0_27] : memref<4x8x1xf32, #tpu.memory_space<vmem>>, vector<4x8x1xf32>
    tpu.vector_store %arg9[%c0_25, %c0_26, %c0_27], %29 {strides = array<i32>} : memref<4x8x1xf32, #tpu.memory_space<vmem>>, vector<4x8x1xf32>,
    %cst_28 = arith.constant dense<0.000000e+00> : vector<4x8x8xf32>
    %31 = tpu.matmul %24, %8, %cst_28 {dimension_numbers = #tpu.dot_dimension_numbers<[2], [1], [1], [2], [0, 0, 0, 1, 1, 2], [0], [0]>} : vector<4x8x8xf32>, vector<4x8x8xf32>, vector<4x8x8xf32> -> vector<4x8x8xf32>
    %c0_29 = arith.constant 0 : index
    %c0_30 = arith.constant 0 : index
    %c0_31 = arith.constant 0 : index
    %32 = vector.load %arg10[%c0_29, %c0_30, %c0_31] : memref<4x8x8xf32, #tpu.memory_space<vmem>>, vector<4x8x8xf32>
    %33 = vector.broadcast %21 : vector<4x8x1xf32> to vector<4x8x8xf32>
    %34 = arith.mulf %33, %32 : vector<4x8x8xf32>
    %35 = arith.addf %34, %31 : vector<4x8x8xf32>
    %c0_32 = arith.constant 0 : index
    %c0_33 = arith.constant 0 : index
    %c0_34 = arith.constant 0 : index
    %36 = vector.load %arg10[%c0_32, %c0_33, %c0_34] : memref<4x8x8xf32, #tpu.memory_space<vmem>>, vector<4x8x8xf32>
    tpu.vector_store %arg10[%c0_32, %c0_33, %c0_34], %35 {strides = array<i32>} : memref<4x8x8xf32, #tpu.memory_space<vmem>>, vector<4x8x8xf32>,
    %c0_35 = arith.constant 0 : index
    %c0_36 = arith.constant 0 : index
    %c0_37 = arith.constant 0 : index
    %37 = vector.load %arg8[%c0_35, %c0_36, %c0_37] : memref<4x8x1xf32, #tpu.memory_space<vmem>>, vector<4x8x1xf32>
    tpu.vector_store %arg8[%c0_35, %c0_36, %c0_37], %19 {strides = array<i32>} : memref<4x8x1xf32, #tpu.memory_space<vmem>>, vector<4x8x1xf32>,
    %c0_i32_38 = arith.constant 0 : i32
    %38 = arith.cmpi eq, %arg2, %c0_i32_38 : i32
    %39 = arith.extui %38 : i1 to i32
    %c0_i32_39 = arith.constant 0 : i32
    %40 = arith.cmpi ne, %39, %c0_i32_39 : i32
    scf.if %40 {
      %c0_40 = arith.constant 0 : index
      %c0_41 = arith.constant 0 : index
      %c0_42 = arith.constant 0 : index
      %41 = vector.load %arg9[%c0_40, %c0_41, %c0_42] : memref<4x8x1xf32, #tpu.memory_space<vmem>>, vector<4x8x1xf32>
      %42 = tpu.reciprocal %41 {approx = true} : vector<4x8x1xf32> -> vector<4x8x1xf32>
      %c0_43 = arith.constant 0 : index
      %c0_44 = arith.constant 0 : index
      %c0_45 = arith.constant 0 : index
      %43 = vector.load %arg10[%c0_43, %c0_44, %c0_45] : memref<4x8x8xf32, #tpu.memory_space<vmem>>, vector<1x8x8xf32>
      %44 = vector.shape_cast %43 : vector<1x8x8xf32> to vector<8x8xf32>
      %45 = vector.extract_strided_slice %42 {offsets = [0, 0, 0], sizes = [1, 8, 1], strides = [1, 1, 1]} : vector<4x8x1xf32> to vector<1x8x1xf32>
      %46 = vector.shape_cast %45 : vector<1x8x1xf32> to vector<8x1xf32>
      %47 = vector.broadcast %46 : vector<8x1xf32> to vector<8x8xf32>
      %48 = arith.mulf %44, %47 : vector<8x8xf32>
      %c0_46 = arith.constant 0 : index
      %c0_47 = arith.constant 0 : index
      %c0_48 = arith.constant 0 : index
      %c0_49 = arith.constant 0 : index
      %49 = vector.load %arg7[%c0_46, %c0_47, %c0_48, %c0_49] : memref<1x8x4x8xf32, #tpu.memory_space<vmem>>, vector<1x8x1x8xf32>
      %50 = vector.shape_cast %49 : vector<1x8x1x8xf32> to vector<8x8xf32>
      %51 = vector.shape_cast %48 : vector<8x8xf32> to vector<1x8x1x8xf32>
      tpu.vector_store %arg7[%c0_46, %c0_47, %c0_48, %c0_49], %51 {strides = array<i32>} : memref<1x8x4x8xf32, #tpu.memory_space<vmem>>, vector<1x8x1x8xf32>,
      %c1 = arith.constant 1 : index
      %c0_50 = arith.constant 0 : index
      %c0_51 = arith.constant 0 : index
      %52 = vector.load %arg10[%c1, %c0_50, %c0_51] : memref<4x8x8xf32, #tpu.memory_space<vmem>>, vector<1x8x8xf32>
      %53 = vector.shape_cast %52 : vector<1x8x8xf32> to vector<8x8xf32>
      %54 = vector.extract_strided_slice %42 {offsets = [1, 0, 0], sizes = [1, 8, 1], strides = [1, 1, 1]} : vector<4x8x1xf32> to vector<1x8x1xf32>
      %55 = vector.shape_cast %54 : vector<1x8x1xf32> to vector<8x1xf32>
      %56 = vector.broadcast %55 : vector<8x1xf32> to vector<8x8xf32>
      %57 = arith.mulf %53, %56 : vector<8x8xf32>
      %c0_52 = arith.constant 0 : index
      %c0_53 = arith.constant 0 : index
      %c1_54 = arith.constant 1 : index
      %c0_55 = arith.constant 0 : index
      %58 = vector.load %arg7[%c0_52, %c0_53, %c1_54, %c0_55] : memref<1x8x4x8xf32, #tpu.memory_space<vmem>>, vector<1x8x1x8xf32>
      %59 = vector.shape_cast %58 : vector<1x8x1x8xf32> to vector<8x8xf32>
      %60 = vector.shape_cast %57 : vector<8x8xf32> to vector<1x8x1x8xf32>
      tpu.vector_store %arg7[%c0_52, %c0_53, %c1_54, %c0_55], %60 {strides = array<i32>} : memref<1x8x4x8xf32, #tpu.memory_space<vmem>>, vector<1x8x1x8xf32>,
      %c2 = arith.constant 2 : index
      %c0_56 = arith.constant 0 : index
      %c0_57 = arith.constant 0 : index
      %61 = vector.load %arg10[%c2, %c0_56, %c0_57] : memref<4x8x8xf32, #tpu.memory_space<vmem>>, vector<1x8x8xf32>
      %62 = vector.shape_cast %61 : vector<1x8x8xf32> to vector<8x8xf32>
      %63 = vector.extract_strided_slice %42 {offsets = [2, 0, 0], sizes = [1, 8, 1], strides = [1, 1, 1]} : vector<4x8x1xf32> to vector<1x8x1xf32>
      %64 = vector.shape_cast %63 : vector<1x8x1xf32> to vector<8x1xf32>
      %65 = vector.broadcast %64 : vector<8x1xf32> to vector<8x8xf32>
      %66 = arith.mulf %62, %65 : vector<8x8xf32>
      %c0_58 = arith.constant 0 : index
      %c0_59 = arith.constant 0 : index
      %c2_60 = arith.constant 2 : index
      %c0_61 = arith.constant 0 : index
      %67 = vector.load %arg7[%c0_58, %c0_59, %c2_60, %c0_61] : memref<1x8x4x8xf32, #tpu.memory_space<vmem>>, vector<1x8x1x8xf32>
      %68 = vector.shape_cast %67 : vector<1x8x1x8xf32> to vector<8x8xf32>
      %69 = vector.shape_cast %66 : vector<8x8xf32> to vector<1x8x1x8xf32>
      tpu.vector_store %arg7[%c0_58, %c0_59, %c2_60, %c0_61], %69 {strides = array<i32>} : memref<1x8x4x8xf32, #tpu.memory_space<vmem>>, vector<1x8x1x8xf32>,
      %c3 = arith.constant 3 : index
      %c0_62 = arith.constant 0 : index
      %c0_63 = arith.constant 0 : index
      %70 = vector.load %arg10[%c3, %c0_62, %c0_63] : memref<4x8x8xf32, #tpu.memory_space<vmem>>, vector<1x8x8xf32>
      %71 = vector.shape_cast %70 : vector<1x8x8xf32> to vector<8x8xf32>
      %72 = vector.extract_strided_slice %42 {offsets = [3, 0, 0], sizes = [1, 8, 1], strides = [1, 1, 1]} : vector<4x8x1xf32> to vector<1x8x1xf32>
      %73 = vector.shape_cast %72 : vector<1x8x1xf32> to vector<8x1xf32>
      %74 = vector.broadcast %73 : vector<8x1xf32> to vector<8x8xf32>
      %75 = arith.mulf %71, %74 : vector<8x8xf32>
      %c0_64 = arith.constant 0 : index
      %c0_65 = arith.constant 0 : index
      %c3_66 = arith.constant 3 : index
      %c0_67 = arith.constant 0 : index
      %76 = vector.load %arg7[%c0_64, %c0_65, %c3_66, %c0_67] : memref<1x8x4x8xf32, #tpu.memory_space<vmem>>, vector<1x8x1x8xf32>
      %77 = vector.shape_cast %76 : vector<1x8x1x8xf32> to vector<8x8xf32>
      %78 = vector.shape_cast %75 : vector<8x8xf32> to vector<1x8x1x8xf32>
      tpu.vector_store %arg7[%c0_64, %c0_65, %c3_66, %c0_67], %78 {strides = array<i32>} : memref<1x8x4x8xf32, #tpu.memory_space<vmem>>, vector<1x8x1x8xf32>,
    } else {
    }
    return
  }
  func.func @transform_0(%arg0: i32, %arg1: i32, %arg2: i32) -> (i32, i32, i32, i32) {
    %c0_i32 = arith.constant 0 : i32
    %c0_i32_0 = arith.constant 0 : i32
    %c0_i32_1 = arith.constant 0 : i32
    return %arg0, %c0_i32, %arg1, %c0_i32_0 : i32, i32, i32, i32
  }
  func.func @transform_1(%arg0: i32, %arg1: i32, %arg2: i32) -> (i32, i32, i32, i32) {
    %c0_i32 = arith.constant 0 : i32
    %c0_i32_0 = arith.constant 0 : i32
    %c0_i32_1 = arith.constant 0 : i32
    return %arg0, %c0_i32, %arg2, %c0_i32_0 : i32, i32, i32, i32
  }
  func.func @transform_2(%arg0: i32, %arg1: i32, %arg2: i32) -> (i32, i32, i32, i32) {
    %c0_i32 = arith.constant 0 : i32
    %c0_i32_0 = arith.constant 0 : i32
    %c0_i32_1 = arith.constant 0 : i32
    return %arg0, %c0_i32, %arg2, %c0_i32_0 : i32, i32, i32, i32
  }
  func.func @transform_3(%arg0: i32, %arg1: i32, %arg2: i32) -> (i32, i32, i32, i32) {
    %c0_i32 = arith.constant 0 : i32
    %c0_i32_0 = arith.constant 0 : i32
    %c0_i32_1 = arith.constant 0 : i32
    return %c0_i32, %c0_i32_0, %arg1, %arg2 : i32, i32, i32, i32
  }
  func.func @transform_4(%arg0: i32, %arg1: i32, %arg2: i32) -> (i32, i32, i32, i32) {
    %c0_i32 = arith.constant 0 : i32
    %c0_i32_0 = arith.constant 0 : i32
    %c0_i32_1 = arith.constant 0 : i32
    return %arg0, %arg1, %c0_i32, %c0_i32_0 : i32, i32, i32, i32
  }
}

</mosaic_0001>

<llo_original>
// kernel: tpu_custom_call.1
$region0: #{tpu_custom_call.1}
  #allocation0 [shape = 'u32[]', space=smem, size = 0x4, offset = 0x4, fixed_abs, tag = 'smem constant byte address 0x4 - core index']
  #allocation1 [shape = 'u32[144,128]{1,0:T(1,128)}', space=vmem, size = 0x12000, scoped, tag = 'internal scratch']
  #allocation2 [shape = 'f32[4,8,1]{2,1,0:T(8,128)}', space=vmem, size = 0x4000, scoped, tag = 'scratch operand']
  #allocation3 [shape = 'f32[4,8,1]{2,1,0:T(8,128)}', space=vmem, size = 0x4000, scoped, tag = 'scratch operand']
  #allocation4 [shape = 'f32[4,8,8]{2,1,0:T(8,128)}', space=vmem, size = 0x4000, scoped, tag = 'scratch operand']
  %s0 = inlined_call_operand.hbm [shape: f32[2,4,8,8], index: 0, kind: input, shape index: {}]
  %s1 = inlined_call_operand.hbm [shape: f32[2,4,8,8], index: 1, kind: input, shape index: {}]
  %s2 = inlined_call_operand.hbm [shape: f32[2,4,8,8], index: 2, kind: input, shape index: {}]
  %s3 = inlined_call_operand.hbm [shape: f32[1,1,8,8], index: 3, kind: input, shape index: {}]
  %s4 = inlined_call_operand.hbm [shape: f32[2,8,4,8], index: 4, kind: output, shape index: {}]
  %s5 = sld [smem:[#allocation0]]
  $region73: #{tpu_custom_call.1} parent=0
    _
  %s7 = ssub.s32 1, %s5
  %s8 = scalar_select 0, %s7, %s5
  $region1: #{tpu_custom_call.1} parent=0
    #allocation5 [shape = 'u8[32768]{0}', space=vmem, size = 0x8000, scoped, tag = 'input window, operand 0']
    #allocation6 [shape = 's32[2]{0}', space=sflag, size = 0x8, scoped, tag = 'scoped memory for tpu_custom_call.1']
    #allocation7 [shape = 's32[2]{0}', space=sflag, size = 0x8, scoped, tag = 'scoped memory for tpu_custom_call.1']
    #allocation8 [shape = 'u8[32768]{0}', space=vmem, size = 0x8000, scoped, tag = 'input window, operand 1']
    #allocation9 [shape = 's32[2]{0}', space=sflag, size = 0x8, scoped, tag = 'scoped memory for tpu_custom_call.1']
    #allocation10 [shape = 'u8[32768]{0}', space=vmem, size = 0x8000, scoped, tag = 'input window, operand 2']
    #allocation11 [shape = 'u8[4096]{0}', space=vmem, size = 0x1000, scoped, tag = 'input window, operand 3, single buffered']
    #allocation12 [shape = 's32[1]{0}', space=sflag, size = 0x4, scoped, tag = 'scoped memory for tpu_custom_call.1']
    #allocation13 [shape = 'u8[32768]{0}', space=vmem, size = 0x8000, scoped, tag = 'output window, operand 0']
    %9 = vsyncpa [#allocation6], 0
    %s10 = scalar_lea.sflag [#allocation6], 1
    %11 = vsyncpa %s10, 0
    %12 = vsyncpa [#allocation9], 0
    %s13 = scalar_lea.sflag [#allocation9], 1
    %14 = vsyncpa %s13, 0
    %15 = vsyncpa [#allocation12], 0
    %16 = vsyncpa [#allocation7], 0
    %s17 = scalar_lea.sflag [#allocation7], 1
    %18 = vsyncpa %s17, 0
    loop: start=0, step=1, limit=4
    $region2: #{tpu_custom_call.1} parent=1 // loop_pre_header
      _
    $region3: #{tpu_custom_call.1} parent=1 // loop_header
      %s20 = sphi 0, %s24
      %p21 = scmp.ge.s32.totalorder %s20, 4
      %s27 = sphi 0, %s46
      %s28 = sphi 0, %s42
      %s29 = sphi 0, %s38
      %s30 = sphi 0, %s27
      %s31 = sphi 0, %s28
      %s32 = sphi 0, %s29
      %s33 = sphi 0, %s30
      %s34 = sphi 0, %s31
      %s35 = sphi 0, %s32
      %s51 = sphi 0, %s53
      %s54 = sphi 0, %s51
      %s55 = sphi 0, %s54
      %s71 = sphi 0, %s55
      %s79 = sphi 0, %s81
      %s82 = sphi 0, %s79
      %s83 = sphi 0, %s82
      %s99 = sphi 0, %s83
      %s107 = sphi 0, %s109
      %s110 = sphi 0, %s107
      %s111 = sphi 0, %s110
      %s127 = sphi 0, %s111
      %s135 = sphi 0, %s137
      %s138 = sphi 0, %s135
      %s139 = sphi 0, %s138
      %s155 = sphi 0, %s139
      %s163 = sphi 0, %s165
      %s166 = sphi 0, %s163
      %s167 = sphi 0, %s166
      %s183 = sphi 0, %s167
    $region4: #{tpu_custom_call.1} parent=1 // loop_header_branch
      %23 = sbr.rel (%p21) target = $region8
    $region5: #{tpu_custom_call.1} parent=1 // loop_body
      %s25 = ssub.s32 %s20, 1
      %s26 = ssub.s32 %s20, 2
      %s36 = sadd.s32 1, %s29
      %p37 = scmp.ge.s32.totalorder %s36, 1
      %s38 = scalar_select %p37, 0, %s36
      %s39 = sadd.s32 1, %s28
      %s40 = scalar_select %p37, %s39, %s28
      %p41 = scmp.ge.s32.totalorder %s40, 1
      %s42 = scalar_select %p41, 0, %s40
      %s43 = sadd.s32 1, %s27
      %s44 = scalar_select %p41, %s43, %s27
      %p45 = scmp.ge.s32.totalorder %s44, 2
      %s46 = scalar_select %p45, 0, %s44
      %s47 = ssub.s32 %s27, %s46
      %s48 = ssub.s32 %s28, %s42
      %s49 = sor.u32 %s47, %s48
      %p50 = scmp.eq.s32.totalorder %s49, 0
      %s52 = sadd.s32 %s51, 1
      %s53 = scalar_select %p50, %s51, %s52
      %p56 = pneg %p50
      %p57 = scmp.eq.s32.totalorder %s20, 1
      %p58 = por %p56, %p57
      %p59 = scmp.ne.s32.totalorder %s51, %s54
      %p60 = scmp.eq.s32.totalorder %s20, 0
      %p61 = por %p59, %p60
      %p62 = scmp.ne.s32.totalorder %s51, %s54
      %p63 = scmp.eq.s32.totalorder %s25, 1
      %p64 = por %p62, %p63
      %p65 = scmp.ne.s32.totalorder %s54, %s55
      %p66 = scmp.eq.s32.totalorder %s25, 0
      %p67 = por %p65, %p66
      %p68 = scmp.ne.s32.totalorder %s54, %s55
      %p69 = scmp.eq.s32.totalorder %s26, 1
      %p70 = por %p68, %p69
      %p72 = scmp.ne.s32.totalorder %s55, %s71
      %p73 = scmp.eq.s32.totalorder %s26, 0
      %p74 = por %p72, %p73
      %s75 = ssub.s32 %s27, %s46
      %s76 = ssub.s32 %s29, %s38
      %s77 = sor.u32 %s75, %s76
      %p78 = scmp.eq.s32.totalorder %s77, 0
      %s80 = sadd.s32 %s79, 1
      %s81 = scalar_select %p78, %s79, %s80
      %p84 = pneg %p78
      %p85 = scmp.eq.s32.totalorder %s20, 1
      %p86 = por %p84, %p85
      %p87 = scmp.ne.s32.totalorder %s79, %s82
      %p88 = scmp.eq.s32.totalorder %s20, 0
      %p89 = por %p87, %p88
      %p90 = scmp.ne.s32.totalorder %s79, %s82
      %p91 = scmp.eq.s32.totalorder %s25, 1
      %p92 = por %p90, %p91
      %p93 = scmp.ne.s32.totalorder %s82, %s83
      %p94 = scmp.eq.s32.totalorder %s25, 0
      %p95 = por %p93, %p94
      %p96 = scmp.ne.s32.totalorder %s82, %s83
      %p97 = scmp.eq.s32.totalorder %s26, 1
      %p98 = por %p96, %p97
      %p100 = scmp.ne.s32.totalorder %s83, %s99
      %p101 = scmp.eq.s32.totalorder %s26, 0
      %p102 = por %p100, %p101
      %s103 = ssub.s32 %s27, %s46
      %s104 = ssub.s32 %s29, %s38
      %s105 = sor.u32 %s103, %s104
      %p106 = scmp.eq.s32.totalorder %s105, 0
      %s108 = sadd.s32 %s107, 1
      %s109 = scalar_select %p106, %s107, %s108
      %p112 = pneg %p106
      %p113 = scmp.eq.s32.totalorder %s20, 1
      %p114 = por %p112, %p113
      %p115 = scmp.ne.s32.totalorder %s107, %s110
      %p116 = scmp.eq.s32.totalorder %s20, 0
      %p117 = por %p115, %p116
      %p118 = scmp.ne.s32.totalorder %s107, %s110
      %p119 = scmp.eq.s32.totalorder %s25, 1
      %p120 = por %p118, %p119
      %p121 = scmp.ne.s32.totalorder %s110, %s111
      %p122 = scmp.eq.s32.totalorder %s25, 0
      %p123 = por %p121, %p122
      %p124 = scmp.ne.s32.totalorder %s110, %s111
      %p125 = scmp.eq.s32.totalorder %s26, 1
      %p126 = por %p124, %p125
      %p128 = scmp.ne.s32.totalorder %s111, %s127
      %p129 = scmp.eq.s32.totalorder %s26, 0
      %p130 = por %p128, %p129
      %s131 = ssub.s32 %s28, %s42
      %s132 = ssub.s32 %s29, %s38
      %s133 = sor.u32 %s131, %s132
      %p134 = scmp.eq.s32.totalorder %s133, 0
      %s136 = sadd.s32 %s135, 1
      %s137 = scalar_select %p134, %s135, %s136
      %p140 = pneg %p134
      %p141 = scmp.eq.s32.totalorder %s20, 1
      %p142 = por %p140, %p141
      %p143 = scmp.ne.s32.totalorder %s135, %s138
      %p144 = scmp.eq.s32.totalorder %s20, 0
      %p145 = por %p143, %p144
      %p146 = scmp.ne.s32.totalorder %s135, %s138
      %p147 = scmp.eq.s32.totalorder %s25, 1
      %p148 = por %p146, %p147
      %p149 = scmp.ne.s32.totalorder %s138, %s139
      %p150 = scmp.eq.s32.totalorder %s25, 0
      %p151 = por %p149, %p150
      %p152 = scmp.ne.s32.totalorder %s138, %s139
      %p153 = scmp.eq.s32.totalorder %s26, 1
      %p154 = por %p152, %p153
      %p156 = scmp.ne.s32.totalorder %s139, %s155
      %p157 = scmp.eq.s32.totalorder %s26, 0
      %p158 = por %p156, %p157
      %s159 = ssub.s32 %s27, %s46
      %s160 = ssub.s32 %s28, %s42
      %s161 = sor.u32 %s159, %s160
      %p162 = scmp.eq.s32.totalorder %s161, 0
      %s164 = sadd.s32 %s163, 1
      %s165 = scalar_select %p162, %s163, %s164
      %p168 = pneg %p162
      %p169 = scmp.eq.s32.totalorder %s20, 1
      %p170 = por %p168, %p169
      %p171 = scmp.ne.s32.totalorder %s163, %s166
      %p172 = scmp.eq.s32.totalorder %s20, 0
      %p173 = por %p171, %p172
      %p174 = scmp.ne.s32.totalorder %s163, %s166
      %p175 = scmp.eq.s32.totalorder %s25, 1
      %p176 = por %p174, %p175
      %p177 = scmp.ne.s32.totalorder %s166, %s167
      %p178 = scmp.eq.s32.totalorder %s25, 0
      %p179 = por %p177, %p178
      %p180 = scmp.ne.s32.totalorder %s166, %s167
      %p181 = scmp.eq.s32.totalorder %s26, 1
      %p182 = por %p180, %p181
      %p184 = scmp.ne.s32.totalorder %s167, %s183
      %p185 = scmp.eq.s32.totalorder %s26, 0
      %p186 = por %p184, %p185
      %p187 = scmp.le.s32.totalorder 1, %s20
      %p188 = scmp.lt.s32.totalorder %s20, 3
      %p189 = pnand %p187, %p188
      %p190 = pneg %p189
      // Predicated region
      $region9: #{tpu_custom_call.1} parent=5 // pred_check
        _
      $region10: #{tpu_custom_call.1} parent=5 // pred_check_branch
        %192 = sbr.rel (%p189) target = $region12
      $region11: #{tpu_custom_call.1} parent=5 // pred_region
        %s193 = ssub.s32 %s20, 1
        // Predicated region
        $region13: #{tpu_custom_call.1} parent=11 // pred_check
          %p194 = pneg %p151
        $region14: #{tpu_custom_call.1} parent=11 // pred_check_branch
          %196 = sbr.rel (%p194) target = $region16
        $region15: #{tpu_custom_call.1} parent=11 // pred_region
          %s198 = ssub.s32 128, 128
          %199 = vsyncadd [#allocation12], %s198
          %s200 = sadd.s32 %s32, %s31
          %s201 = smul.addr %s200, 128
          %s202 = scalar_lea.hbm %s3, %s201
          %s204 = sshll.u32 [#allocation11], 4
          %s205 = int_to_ptr.vmem [resolvable:$true] %s204
          %207 = dma.hbm_to_vmem [thread:$0]  %s202, 128, %s205, [#allocation12]
        $region16: #{tpu_custom_call.1} parent=11 // pred_fallthru
          _
      $region12: #{tpu_custom_call.1} parent=5 // pred_fallthru
        _
      %p208 = scmp.lt.s32.totalorder %s20, 2
      // Predicated region
      $region17: #{tpu_custom_call.1} parent=5 // pred_check
        %p209 = pneg %p208
      $region18: #{tpu_custom_call.1} parent=5 // pred_check_branch
        %211 = sbr.rel (%p209) target = $region20
      $region19: #{tpu_custom_call.1} parent=5 // pred_region
        // Predicated region
        $region21: #{tpu_custom_call.1} parent=19 // pred_check
          %p212 = pneg %p61
        $region22: #{tpu_custom_call.1} parent=19 // pred_check_branch
          %214 = sbr.rel (%p212) target = $region24
        $region23: #{tpu_custom_call.1} parent=19 // pred_region
          %s215 = sand.u32 %s51, 1
          %s216 = scalar_lea.sflag [#allocation6], %s215
          %s217 = sand.u32 %s51, 1
          %s218 = smul.addr %s217, 32
          %s219 = scalar_lea.vmem [#allocation5], %s218
          %s221 = ssub.s32 512, 512
          %222 = vsyncadd %s216, %s221
          %s223 = smul.addr %s27, 4
          %s224 = sadd.s32 %s28, %s223
          %s225 = smul.addr %s224, 128
          %s226 = scalar_lea.hbm %s0, %s225
          %s227 = sshll.u32 %s219, 4
          %s228 = int_to_ptr.vmem [resolvable:$true] %s227
          %233 = dma.hbm_to_vmem [thread:$0]  %s226, 512, %s228, %s216, 128, 128, 8
        $region24: #{tpu_custom_call.1} parent=19 // pred_fallthru
          _
        // Predicated region
        $region25: #{tpu_custom_call.1} parent=19 // pred_check
          %p234 = pneg %p89
        $region26: #{tpu_custom_call.1} parent=19 // pred_check_branch
          %236 = sbr.rel (%p234) target = $region28
        $region27: #{tpu_custom_call.1} parent=19 // pred_region
          %s237 = sand.u32 %s20, 1
          %s238 = scalar_lea.sflag [#allocation9], %s237
          %s239 = sand.u32 %s79, 1
          %s240 = smul.addr %s239, 32
          %s241 = scalar_lea.vmem [#allocation8], %s240
          %s243 = ssub.s32 512, 512
          %244 = vsyncadd %s238, %s243
          %s245 = smul.addr %s27, 4
          %s246 = sadd.s32 %s29, %s245
          %s247 = smul.addr %s246, 128
          %s248 = scalar_lea.hbm %s1, %s247
          %s249 = sshll.u32 %s241, 4
          %s250 = int_to_ptr.vmem [resolvable:$true] %s249
          %255 = dma.hbm_to_vmem [thread:$0]  %s248, 512, %s250, %s238, 128, 128, 8
        $region28: #{tpu_custom_call.1} parent=19 // pred_fallthru
          _
        // Predicated region
        $region29: #{tpu_custom_call.1} parent=19 // pred_check
          %p256 = pneg %p117
        $region30: #{tpu_custom_call.1} parent=19 // pred_check_branch
          %258 = sbr.rel (%p256) target = $region32
        $region31: #{tpu_custom_call.1} parent=19 // pred_region
          %s259 = sand.u32 %s20, 1
          %s260 = scalar_lea.sflag [#allocation9], %s259
          %s261 = sand.u32 %s107, 1
          %s262 = smul.addr %s261, 32
          %s263 = scalar_lea.vmem [#allocation10], %s262
          %s265 = ssub.s32 512, 512
          %266 = vsyncadd %s260, %s265
          %s267 = smul.addr %s27, 4
          %s268 = sadd.s32 %s29, %s267
          %s269 = smul.addr %s268, 128
          %s270 = scalar_lea.hbm %s2, %s269
          %s271 = sshll.u32 %s263, 4
          %s272 = int_to_ptr.vmem [resolvable:$true] %s271
          %277 = dma.hbm_to_vmem [thread:$0]  %s270, 512, %s272, %s260, 128, 128, 8
        $region32: #{tpu_custom_call.1} parent=19 // pred_fallthru
          _
      $region20: #{tpu_custom_call.1} parent=5 // pred_fallthru
        _
      %p278 = scmp.le.s32.totalorder 1, %s20
      %p279 = scmp.lt.s32.totalorder %s20, 3
      %p280 = pnand %p278, %p279
      %p281 = pneg %p280
      // Predicated region
      $region33: #{tpu_custom_call.1} parent=5 // pred_check
        _
      $region34: #{tpu_custom_call.1} parent=5 // pred_check_branch
        %283 = sbr.rel (%p280) target = $region36
      $region35: #{tpu_custom_call.1} parent=5 // pred_region
        %s284 = ssub.s32 %s20, 1
        %s285 = sand.u32 %s54, 1
        %s286 = scalar_lea.sflag [#allocation6], %s285
        %s287 = sand.u32 %s54, 1
        %s288 = smul.addr %s287, 32
        %s289 = scalar_lea.vmem [#allocation5], %s288
        // Predicated region
        $region37: #{tpu_custom_call.1} parent=35 // pred_check
          %p290 = pneg %p67
        $region38: #{tpu_custom_call.1} parent=35 // pred_check_branch
          %292 = sbr.rel (%p290) target = $region40
        $region39: #{tpu_custom_call.1} parent=35 // pred_region
          %293 = dma.done %s286, 512
        $region40: #{tpu_custom_call.1} parent=35 // pred_fallthru
          _
        %s294 = sand.u32 %s25, 1
        %s295 = scalar_lea.sflag [#allocation9], %s294
        %s296 = sand.u32 %s82, 1
        %s297 = smul.addr %s296, 32
        %s298 = scalar_lea.vmem [#allocation8], %s297
        // Predicated region
        $region41: #{tpu_custom_call.1} parent=35 // pred_check
          %p299 = pneg %p95
        $region42: #{tpu_custom_call.1} parent=35 // pred_check_branch
          %301 = sbr.rel (%p299) target = $region44
        $region43: #{tpu_custom_call.1} parent=35 // pred_region
          %302 = dma.done %s295, 512
        $region44: #{tpu_custom_call.1} parent=35 // pred_fallthru
          _
        %s303 = sand.u32 %s25, 1
        %s304 = scalar_lea.sflag [#allocation9], %s303
        %s305 = sand.u32 %s110, 1
        %s306 = smul.addr %s305, 32
        %s307 = scalar_lea.vmem [#allocation10], %s306
        // Predicated region
        $region45: #{tpu_custom_call.1} parent=35 // pred_check
          %p308 = pneg %p123
        $region46: #{tpu_custom_call.1} parent=35 // pred_check_branch
          %310 = sbr.rel (%p308) target = $region48
        $region47: #{tpu_custom_call.1} parent=35 // pred_region
          %311 = dma.done %s304, 512
        $region48: #{tpu_custom_call.1} parent=35 // pred_fallthru
          _
        // Predicated region
        $region49: #{tpu_custom_call.1} parent=35 // pred_check
          %p312 = pneg %p151
        $region50: #{tpu_custom_call.1} parent=35 // pred_check_branch
          %314 = sbr.rel (%p312) target = $region52
        $region51: #{tpu_custom_call.1} parent=35 // pred_region
          %315 = dma.done [#allocation12], 128
        $region52: #{tpu_custom_call.1} parent=35 // pred_fallthru
          _
        %s316 = sand.u32 %s54, 1
        %s317 = scalar_lea.sflag [#allocation6], %s316
        %s318 = sand.u32 %s54, 1
        %s319 = smul.addr %s318, 32
        %s320 = scalar_lea.vmem [#allocation5], %s319
        %p321 = pneg %p67
        %p322 = pneg %p64
        %s323 = sand.u32 %s25, 1
        %s324 = scalar_lea.sflag [#allocation9], %s323
        %s325 = sand.u32 %s82, 1
        %s326 = smul.addr %s325, 32
        %s327 = scalar_lea.vmem [#allocation8], %s326
        %p328 = pneg %p95
        %p329 = pneg %p92
        %s330 = sand.u32 %s25, 1
        %s331 = scalar_lea.sflag [#allocation9], %s330
        %s332 = sand.u32 %s110, 1
        %s333 = smul.addr %s332, 32
        %s334 = scalar_lea.vmem [#allocation10], %s333
        %p335 = pneg %p123
        %p336 = pneg %p120
        %p337 = pneg %p151
        %p338 = pneg %p148
        %p339 = pneg %p179
        %p340 = pneg %p176
        %s341 = sand.u32 %s166, 1
        %s342 = scalar_lea.sflag [#allocation7], %s341
        %s343 = sand.u32 %s166, 1
        %s344 = smul.addr %s343, 32
        %s345 = scalar_lea.vmem [#allocation13], %s344
        %s346 = smul.u32 8, %s31
        %p347 = scmp.eq.s32.totalorder %s32, 0
        // Predicated region
        $region53: #{tpu_custom_call.1} parent=35 // pred_check
          %p348 = pneg %p347
        $region54: #{tpu_custom_call.1} parent=35 // pred_check_branch
          %350 = sbr.rel (%p348) target = $region56
        $region55: #{tpu_custom_call.1} parent=35 // pred_region
          %vm351 = vcmask 7168
          %352 = vst.msk [vmem:[#allocation2] sm:$0xff] %vm351, -1e+30
          %353 = vst.msk [vmem:[#allocation2 + $0x8] sm:$0xff] %vm351, -1e+30
          %354 = vst.msk [vmem:[#allocation2 + $0x10] sm:$0xff] %vm351, -1e+30
          %355 = vst.msk [vmem:[#allocation2 + $0x18] sm:$0xff] %vm351, -1e+30
          %356 = vst.msk [vmem:[#allocation3] sm:$0xff] %vm351, 0.0
          %357 = vst.msk [vmem:[#allocation3 + $0x8] sm:$0xff] %vm351, 0.0
          %358 = vst.msk [vmem:[#allocation3 + $0x10] sm:$0xff] %vm351, 0.0
          %359 = vst.msk [vmem:[#allocation3 + $0x18] sm:$0xff] %vm351, 0.0
          %vm360 = vcmask 64512
          %361 = vst.msk [vmem:[#allocation4] sm:$0xff] %vm360, 0.0
          %362 = vst.msk [vmem:[#allocation4 + $0x8] sm:$0xff] %vm360, 0.0
          %363 = vst.msk [vmem:[#allocation4 + $0x10] sm:$0xff] %vm360, 0.0
          %364 = vst.msk [vmem:[#allocation4 + $0x18] sm:$0xff] %vm360, 0.0
        $region56: #{tpu_custom_call.1} parent=35 // pred_fallthru
          _
        %v365 = vld [vmem:[%s289] sm:$0xff]
        %v366 = vld [vmem:[%s289 + $0x8] sm:$0xff]
        %v367 = vld [vmem:[%s289 + $0x10] sm:$0xff]
        %v368 = vld [vmem:[%s289 + $0x18] sm:$0xff]
        %v369 = vld [vmem:[%s298] sm:$0xff]
        %v370 = vld [vmem:[%s298 + $0x8] sm:$0xff]
        %v371 = vld [vmem:[%s298 + $0x10] sm:$0xff]
        %v372 = vld [vmem:[%s298 + $0x18] sm:$0xff]
        %v373 = vld [vmem:[%s307] sm:$0xff]
        %v374 = vld [vmem:[%s307 + $0x8] sm:$0xff]
        %v375 = vld [vmem:[%s307 + $0x10] sm:$0xff]
        %v376 = vld [vmem:[%s307 + $0x18] sm:$0xff]
        %v377 = vld [vmem:[#allocation11] sm:$0xff]
        %vm378 = vcmask 64512
        %v380 = vsel %vm378, %v365, 0
        %v383 = vsel %vm378, %v369, 0
        %385 = vmatprep.subr.mxu0 0.0
        %386 = vmatpush1.xpose.msra.mxu0 0.0
        %387 = vmatprep.subr.mxu0 0.0
        %388 = vmatpush1.xpose.msra.mxu0 0.0
        %389 = vmatprep.subr.mxu0 0.0
        %390 = vmatpush1.xpose.msra.mxu0 0.0
        %391 = vmatprep.subr.mxu0 0.0
        %392 = vmatpush1.xpose.msra.mxu0 0.0
        %393 = vmatprep.subr.mxu0 0.0
        %394 = vmatpush1.xpose.msra.mxu0 0.0
        %395 = vmatprep.subr.mxu0 0.0
        %396 = vmatpush1.xpose.msra.mxu0 0.0
        %397 = vmatprep.subr.mxu0 0.0
        %398 = vmatpush1.xpose.msra.mxu0 0.0
        %399 = vmatprep.subr.mxu0 0.0
        %400 = vmatpush1.xpose.msra.mxu0 0.0
        %401 = vmatprep.subr.mxu0 0.0
        %402 = vmatpush1.xpose.msra.mxu0 0.0
        %403 = vmatprep.subr.mxu0 0.0
        %404 = vmatpush1.xpose.msra.mxu0 0.0
        %405 = vmatprep.subr.mxu0 0.0
        %406 = vmatpush1.xpose.msra.mxu0 0.0
        %407 = vmatprep.subr.mxu0 0.0
        %408 = vmatpush1.xpose.msra.mxu0 0.0
        %409 = vmatprep.subr.mxu0 0.0
        %410 = vmatpush1.xpose.msra.mxu0 0.0
        %411 = vmatprep.subr.mxu0 0.0
        %412 = vmatpush1.xpose.msra.mxu0 0.0
        %413 = vmatprep.subr.mxu0 0.0
        %414 = vmatpush1.xpose.msra.mxu0 0.0
        %415 = vmatprep.subr.mxu0 0.0
        %416 = vmatpush1.xpose.msra.mxu0 %v383
        %417 = vmatprep.subr.mxu0 0.0
        %418 = vmatpush2.xpose.msra.mxu0 0.0
        %419 = vmatprep.subr.mxu0 0.0
        %420 = vmatpush2.xpose.msra.mxu0 0.0
        %421 = vmatprep.subr.mxu0 0.0
        %422 = vmatpush2.xpose.msra.mxu0 0.0
        %423 = vmatprep.subr.mxu0 0.0
        %424 = vmatpush2.xpose.msra.mxu0 0.0
        %425 = vmatprep.subr.mxu0 0.0
        %426 = vmatpush2.xpose.msra.mxu0 0.0
        %427 = vmatprep.subr.mxu0 0.0
        %428 = vmatpush2.xpose.msra.mxu0 0.0
        %429 = vmatprep.subr.mxu0 0.0
        %430 = vmatpush2.xpose.msra.mxu0 0.0
        %431 = vmatprep.subr.mxu0 0.0
        %432 = vmatpush2.xpose.msra.mxu0 0.0
        %433 = vmatprep.subr.mxu0 0.0
        %434 = vmatpush2.xpose.msra.mxu0 0.0
        %435 = vmatprep.subr.mxu0 0.0
        %436 = vmatpush2.xpose.msra.mxu0 0.0
        %437 = vmatprep.subr.mxu0 0.0
        %438 = vmatpush2.xpose.msra.mxu0 0.0
        %439 = vmatprep.subr.mxu0 0.0
        %440 = vmatpush2.xpose.msra.mxu0 0.0
        %441 = vmatprep.subr.mxu0 0.0
        %442 = vmatpush2.xpose.msra.mxu0 0.0
        %443 = vmatprep.subr.mxu0 0.0
        %444 = vmatpush2.xpose.msra.mxu0 0.0
        %445 = vmatprep.subr.mxu0 0.0
        %446 = vmatpush2.xpose.msra.mxu0 0.0
        %447 = vmatprep.subr.mxu0 0.0
        %448 = vmatpush2.xpose.msra.mxu0 0.0
        %449 = vmatprep.mubr.f32.mxu0 0.0
        %450 = vmatmul.mubr.f32.gmra.mxu0 %v380
        %v451 = vpop.f32.mrf.mxu0
        %v452 = vadd.f32 0.0, %v451
        %v453 = vpop.f32.mrf.mxu0
        %454 = vdwg.mxu0
        %v456 = vsel %vm378, %v366, 0
        %v459 = vsel %vm378, %v370, 0
        %461 = vmatprep.subr.mxu0 0.0
        %462 = vmatpush1.xpose.msra.mxu0 0.0
        %463 = vmatprep.subr.mxu0 0.0
        %464 = vmatpush1.xpose.msra.mxu0 0.0
        %465 = vmatprep.subr.mxu0 0.0
        %466 = vmatpush1.xpose.msra.mxu0 0.0
        %467 = vmatprep.subr.mxu0 0.0
        %468 = vmatpush1.xpose.msra.mxu0 0.0
        %469 = vmatprep.subr.mxu0 0.0
        %470 = vmatpush1.xpose.msra.mxu0 0.0
        %471 = vmatprep.subr.mxu0 0.0
        %472 = vmatpush1.xpose.msra.mxu0 0.0
        %473 = vmatprep.subr.mxu0 0.0
        %474 = vmatpush1.xpose.msra.mxu0 0.0
        %475 = vmatprep.subr.mxu0 0.0
        %476 = vmatpush1.xpose.msra.mxu0 0.0
        %477 = vmatprep.subr.mxu0 0.0
        %478 = vmatpush1.xpose.msra.mxu0 0.0
        %479 = vmatprep.subr.mxu0 0.0
        %480 = vmatpush1.xpose.msra.mxu0 0.0
        %481 = vmatprep.subr.mxu0 0.0
        %482 = vmatpush1.xpose.msra.mxu0 0.0
        %483 = vmatprep.subr.mxu0 0.0
        %484 = vmatpush1.xpose.msra.mxu0 0.0
        %485 = vmatprep.subr.mxu0 0.0
        %486 = vmatpush1.xpose.msra.mxu0 0.0
        %487 = vmatprep.subr.mxu0 0.0
        %488 = vmatpush1.xpose.msra.mxu0 0.0
        %489 = vmatprep.subr.mxu0 0.0
        %490 = vmatpush1.xpose.msra.mxu0 0.0
        %491 = vmatprep.subr.mxu0 0.0
        %492 = vmatpush1.xpose.msra.mxu0 %v459
        %493 = vmatprep.subr.mxu0 0.0
        %494 = vmatpush2.xpose.msra.mxu0 0.0
        %495 = vmatprep.subr.mxu0 0.0
        %496 = vmatpush2.xpose.msra.mxu0 0.0
        %497 = vmatprep.subr.mxu0 0.0
        %498 = vmatpush2.xpose.msra.mxu0 0.0
        %499 = vmatprep.subr.mxu0 0.0
        %500 = vmatpush2.xpose.msra.mxu0 0.0
        %501 = vmatprep.subr.mxu0 0.0
        %502 = vmatpush2.xpose.msra.mxu0 0.0
        %503 = vmatprep.subr.mxu0 0.0
        %504 = vmatpush2.xpose.msra.mxu0 0.0
        %505 = vmatprep.subr.mxu0 0.0
        %506 = vmatpush2.xpose.msra.mxu0 0.0
        %507 = vmatprep.subr.mxu0 0.0
        %508 = vmatpush2.xpose.msra.mxu0 0.0
        %509 = vmatprep.subr.mxu0 0.0
        %510 = vmatpush2.xpose.msra.mxu0 0.0
        %511 = vmatprep.subr.mxu0 0.0
        %512 = vmatpush2.xpose.msra.mxu0 0.0
        %513 = vmatprep.subr.mxu0 0.0
        %514 = vmatpush2.xpose.msra.mxu0 0.0
        %515 = vmatprep.subr.mxu0 0.0
        %516 = vmatpush2.xpose.msra.mxu0 0.0
        %517 = vmatprep.subr.mxu0 0.0
        %518 = vmatpush2.xpose.msra.mxu0 0.0
        %519 = vmatprep.subr.mxu0 0.0
        %520 = vmatpush2.xpose.msra.mxu0 0.0
        %521 = vmatprep.subr.mxu0 0.0
        %522 = vmatpush2.xpose.msra.mxu0 0.0
        %523 = vmatprep.subr.mxu0 0.0
        %524 = vmatpush2.xpose.msra.mxu0 0.0
        %525 = vmatprep.mubr.f32.mxu0 0.0
        %526 = vmatmul.mubr.f32.gmra.mxu0 %v456
        %v527 = vpop.f32.mrf.mxu0
        %v528 = vadd.f32 0.0, %v527
        %v529 = vpop.f32.mrf.mxu0
        %530 = vdwg.mxu0
        %v532 = vsel %vm378, %v367, 0
        %v535 = vsel %vm378, %v371, 0
        %537 = vmatprep.subr.mxu0 0.0
        %538 = vmatpush1.xpose.msra.mxu0 0.0
        %539 = vmatprep.subr.mxu0 0.0
        %540 = vmatpush1.xpose.msra.mxu0 0.0
        %541 = vmatprep.subr.mxu0 0.0
        %542 = vmatpush1.xpose.msra.mxu0 0.0
        %543 = vmatprep.subr.mxu0 0.0
        %544 = vmatpush1.xpose.msra.mxu0 0.0
        %545 = vmatprep.subr.mxu0 0.0
        %546 = vmatpush1.xpose.msra.mxu0 0.0
        %547 = vmatprep.subr.mxu0 0.0
        %548 = vmatpush1.xpose.msra.mxu0 0.0
        %549 = vmatprep.subr.mxu0 0.0
        %550 = vmatpush1.xpose.msra.mxu0 0.0
        %551 = vmatprep.subr.mxu0 0.0
        %552 = vmatpush1.xpose.msra.mxu0 0.0
        %553 = vmatprep.subr.mxu0 0.0
        %554 = vmatpush1.xpose.msra.mxu0 0.0
        %555 = vmatprep.subr.mxu0 0.0
        %556 = vmatpush1.xpose.msra.mxu0 0.0
        %557 = vmatprep.subr.mxu0 0.0
        %558 = vmatpush1.xpose.msra.mxu0 0.0
        %559 = vmatprep.subr.mxu0 0.0
        %560 = vmatpush1.xpose.msra.mxu0 0.0
        %561 = vmatprep.subr.mxu0 0.0
        %562 = vmatpush1.xpose.msra.mxu0 0.0
        %563 = vmatprep.subr.mxu0 0.0
        %564 = vmatpush1.xpose.msra.mxu0 0.0
        %565 = vmatprep.subr.mxu0 0.0
        %566 = vmatpush1.xpose.msra.mxu0 0.0
        %567 = vmatprep.subr.mxu0 0.0
        %568 = vmatpush1.xpose.msra.mxu0 %v535
        %569 = vmatprep.subr.mxu0 0.0
        %570 = vmatpush2.xpose.msra.mxu0 0.0
        %571 = vmatprep.subr.mxu0 0.0
        %572 = vmatpush2.xpose.msra.mxu0 0.0
        %573 = vmatprep.subr.mxu0 0.0
        %574 = vmatpush2.xpose.msra.mxu0 0.0
        %575 = vmatprep.subr.mxu0 0.0
        %576 = vmatpush2.xpose.msra.mxu0 0.0
        %577 = vmatprep.subr.mxu0 0.0
        %578 = vmatpush2.xpose.msra.mxu0 0.0
        %579 = vmatprep.subr.mxu0 0.0
        %580 = vmatpush2.xpose.msra.mxu0 0.0
        %581 = vmatprep.subr.mxu0 0.0
        %582 = vmatpush2.xpose.msra.mxu0 0.0
        %583 = vmatprep.subr.mxu0 0.0
        %584 = vmatpush2.xpose.msra.mxu0 0.0
        %585 = vmatprep.subr.mxu0 0.0
        %586 = vmatpush2.xpose.msra.mxu0 0.0
        %587 = vmatprep.subr.mxu0 0.0
        %588 = vmatpush2.xpose.msra.mxu0 0.0
        %589 = vmatprep.subr.mxu0 0.0
        %590 = vmatpush2.xpose.msra.mxu0 0.0
        %591 = vmatprep.subr.mxu0 0.0
        %592 = vmatpush2.xpose.msra.mxu0 0.0
        %593 = vmatprep.subr.mxu0 0.0
        %594 = vmatpush2.xpose.msra.mxu0 0.0
        %595 = vmatprep.subr.mxu0 0.0
        %596 = vmatpush2.xpose.msra.mxu0 0.0
        %597 = vmatprep.subr.mxu0 0.0
        %598 = vmatpush2.xpose.msra.mxu0 0.0
        %599 = vmatprep.subr.mxu0 0.0
        %600 = vmatpush2.xpose.msra.mxu0 0.0
        %601 = vmatprep.mubr.f32.mxu0 0.0
        %602 = vmatmul.mubr.f32.gmra.mxu0 %v532
        %v603 = vpop.f32.mrf.mxu0
        %v604 = vadd.f32 0.0, %v603
        %v605 = vpop.f32.mrf.mxu0
        %606 = vdwg.mxu0
        %v608 = vsel %vm378, %v368, 0
        %v611 = vsel %vm378, %v372, 0
        %613 = vmatprep.subr.mxu0 0.0
        %614 = vmatpush1.xpose.msra.mxu0 0.0
        %615 = vmatprep.subr.mxu0 0.0
        %616 = vmatpush1.xpose.msra.mxu0 0.0
        %617 = vmatprep.subr.mxu0 0.0
        %618 = vmatpush1.xpose.msra.mxu0 0.0
        %619 = vmatprep.subr.mxu0 0.0
        %620 = vmatpush1.xpose.msra.mxu0 0.0
        %621 = vmatprep.subr.mxu0 0.0
        %622 = vmatpush1.xpose.msra.mxu0 0.0
        %623 = vmatprep.subr.mxu0 0.0
        %624 = vmatpush1.xpose.msra.mxu0 0.0
        %625 = vmatprep.subr.mxu0 0.0
        %626 = vmatpush1.xpose.msra.mxu0 0.0
        %627 = vmatprep.subr.mxu0 0.0
        %628 = vmatpush1.xpose.msra.mxu0 0.0
        %629 = vmatprep.subr.mxu0 0.0
        %630 = vmatpush1.xpose.msra.mxu0 0.0
        %631 = vmatprep.subr.mxu0 0.0
        %632 = vmatpush1.xpose.msra.mxu0 0.0
        %633 = vmatprep.subr.mxu0 0.0
        %634 = vmatpush1.xpose.msra.mxu0 0.0
        %635 = vmatprep.subr.mxu0 0.0
        %636 = vmatpush1.xpose.msra.mxu0 0.0
        %637 = vmatprep.subr.mxu0 0.0
        %638 = vmatpush1.xpose.msra.mxu0 0.0
        %639 = vmatprep.subr.mxu0 0.0
        %640 = vmatpush1.xpose.msra.mxu0 0.0
        %641 = vmatprep.subr.mxu0 0.0
        %642 = vmatpush1.xpose.msra.mxu0 0.0
        %643 = vmatprep.subr.mxu0 0.0
        %644 = vmatpush1.xpose.msra.mxu0 %v611
        %645 = vmatprep.subr.mxu0 0.0
        %646 = vmatpush2.xpose.msra.mxu0 0.0
        %647 = vmatprep.subr.mxu0 0.0
        %648 = vmatpush2.xpose.msra.mxu0 0.0
        %649 = vmatprep.subr.mxu0 0.0
        %650 = vmatpush2.xpose.msra.mxu0 0.0
        %651 = vmatprep.subr.mxu0 0.0
        %652 = vmatpush2.xpose.msra.mxu0 0.0
        %653 = vmatprep.subr.mxu0 0.0
        %654 = vmatpush2.xpose.msra.mxu0 0.0
        %655 = vmatprep.subr.mxu0 0.0
        %656 = vmatpush2.xpose.msra.mxu0 0.0
        %657 = vmatprep.subr.mxu0 0.0
        %658 = vmatpush2.xpose.msra.mxu0 0.0
        %659 = vmatprep.subr.mxu0 0.0
        %660 = vmatpush2.xpose.msra.mxu0 0.0
        %661 = vmatprep.subr.mxu0 0.0
        %662 = vmatpush2.xpose.msra.mxu0 0.0
        %663 = vmatprep.subr.mxu0 0.0
        %664 = vmatpush2.xpose.msra.mxu0 0.0
        %665 = vmatprep.subr.mxu0 0.0
        %666 = vmatpush2.xpose.msra.mxu0 0.0
        %667 = vmatprep.subr.mxu0 0.0
        %668 = vmatpush2.xpose.msra.mxu0 0.0
        %669 = vmatprep.subr.mxu0 0.0
        %670 = vmatpush2.xpose.msra.mxu0 0.0
        %671 = vmatprep.subr.mxu0 0.0
        %672 = vmatpush2.xpose.msra.mxu0 0.0
        %673 = vmatprep.subr.mxu0 0.0
        %674 = vmatpush2.xpose.msra.mxu0 0.0
        %675 = vmatprep.subr.mxu0 0.0
        %676 = vmatpush2.xpose.msra.mxu0 0.0
        %677 = vmatprep.mubr.f32.mxu0 0.0
        %678 = vmatmul.mubr.f32.gmra.mxu0 %v608
        %v679 = vpop.f32.mrf.mxu0
        %v680 = vadd.f32 0.0, %v679
        %v681 = vpop.f32.mrf.mxu0
        %682 = vdwg.mxu0
        %v683 = vmul.f32 %v452, 0.17677669
        %v684 = vmul.f32 %v528, 0.17677669
        %v685 = vmul.f32 %v604, 0.17677669
        %v686 = vmul.f32 %v680, 0.17677669
        %v687 = vadd.f32 %v683, %v377
        %v688 = vadd.f32 %v684, %v377
        %v689 = vadd.f32 %v685, %v377
        %v690 = vadd.f32 %v686, %v377
        %v691 = vld [vmem:[#allocation2] sm:$0xff]
        %v692 = vld [vmem:[#allocation2 + $0x8] sm:$0xff]
        %v693 = vld [vmem:[#allocation2 + $0x10] sm:$0xff]
        %v694 = vld [vmem:[#allocation2 + $0x18] sm:$0xff]
        %v695 = vsel %vm378, %v687, -inf
        %696 = vmax.xlane.f32.xlu0 %v695
        %v697 = vpop.xlane.xlu0 %696
        %v698 = vsel %vm378, %v688, -inf
        %699 = vmax.xlane.f32.xlu0 %v698
        %v700 = vpop.xlane.xlu0 %699
        %v701 = vsel %vm378, %v689, -inf
        %702 = vmax.xlane.f32.xlu0 %v701
        %v703 = vpop.xlane.xlu0 %702
        %v704 = vsel %vm378, %v690, -inf
        %705 = vmax.xlane.f32.xlu0 %v704
        %v706 = vpop.xlane.xlu0 %705
        %v707 = vmax.f32 %v691, %v697
        %v708 = vmax.f32 %v692, %v700
        %v709 = vmax.f32 %v693, %v703
        %v710 = vmax.f32 %v694, %v706
        %v711 = vsub.f32 %v691, %v707
        %v712 = vsub.f32 %v692, %v708
        %v713 = vsub.f32 %v693, %v709
        %v714 = vsub.f32 %v694, %v710
        %v715 = vmul.f32 %v711, 1.442695
        %v716 = vpow.pop %v715
        %v717 = vmul.f32 %v712, 1.442695
        %v718 = vpow.pop %v717
        %v719 = vmul.f32 %v713, 1.442695
        %v720 = vpow.pop %v719
        %v721 = vmul.f32 %v714, 1.442695
        %v722 = vpow.pop %v721
        %724 = vset.pattern.permute.xlu0 0
        %725 = vperm.xlu0 %724, %v707
        %v726 = vpop.permute.xlu0 %725
        %729 = vset.pattern.permute.xlu0 0
        %730 = vperm.xlu0 %729, %v708
        %v731 = vpop.permute.xlu0 %730
        %734 = vset.pattern.permute.xlu0 0
        %735 = vperm.xlu0 %734, %v709
        %v736 = vpop.permute.xlu0 %735
        %739 = vset.pattern.permute.xlu0 0
        %740 = vperm.xlu0 %739, %v710
        %v741 = vpop.permute.xlu0 %740
        %v743 = vsub.f32 %v687, %v726
        %v744 = vsub.f32 %v688, %v731
        %v745 = vsub.f32 %v689, %v736
        %v746 = vsub.f32 %v690, %v741
        %v747 = vmul.f32 %v743, 1.442695
        %v748 = vpow.pop %v747
        %v749 = vmul.f32 %v744, 1.442695
        %v750 = vpow.pop %v749
        %v751 = vmul.f32 %v745, 1.442695
        %v752 = vpow.pop %v751
        %v753 = vmul.f32 %v746, 1.442695
        %v754 = vpow.pop %v753
        %v755 = vld [vmem:[#allocation3] sm:$0xff]
        %v756 = vld [vmem:[#allocation3 + $0x8] sm:$0xff]
        %v757 = vld [vmem:[#allocation3 + $0x10] sm:$0xff]
        %v758 = vld [vmem:[#allocation3 + $0x18] sm:$0xff]
        %v759 = vmul.f32 %v716, %v755
        %v760 = vmul.f32 %v718, %v756
        %v761 = vmul.f32 %v720, %v757
        %v762 = vmul.f32 %v722, %v758
        %v763 = vsel %vm378, %v748, 0.0
        %764 = vadd.xlane.f32.xlu0 %v763
        %v765 = vpop.xlane.xlu0 %764
        %v766 = vsel %vm378, %v750, 0.0
        %767 = vadd.xlane.f32.xlu0 %v766
        %v768 = vpop.xlane.xlu0 %767
        %v769 = vsel %vm378, %v752, 0.0
        %770 = vadd.xlane.f32.xlu0 %v769
        %v771 = vpop.xlane.xlu0 %770
        %v772 = vsel %vm378, %v754, 0.0
        %773 = vadd.xlane.f32.xlu0 %v772
        %v774 = vpop.xlane.xlu0 %773
        %v775 = vadd.f32 %v759, %v765
        %v776 = vadd.f32 %v760, %v768
        %v777 = vadd.f32 %v761, %v771
        %v778 = vadd.f32 %v762, %v774
        %vm779 = vcmask 7168
        %780 = vst.msk [vmem:[#allocation3] sm:$0xff] %vm779, %v775
        %781 = vst.msk [vmem:[#allocation3 + $0x8] sm:$0xff] %vm779, %v776
        %782 = vst.msk [vmem:[#allocation3 + $0x10] sm:$0xff] %vm779, %v777
        %783 = vst.msk [vmem:[#allocation3 + $0x18] sm:$0xff] %vm779, %v778
        %v785 = vsel %vm378, %v748, 0
        %787 = vmatprep.subr.mxu0 0.0
        %788 = vmatpush1.msra.mxu0 0.0
        %789 = vmatprep.subr.mxu0 0.0
        %790 = vmatpush1.msra.mxu0 0.0
        %791 = vmatprep.subr.mxu0 0.0
        %792 = vmatpush1.msra.mxu0 0.0
        %793 = vmatprep.subr.mxu0 0.0
        %794 = vmatpush1.msra.mxu0 0.0
        %795 = vmatprep.subr.mxu0 0.0
        %796 = vmatpush1.msra.mxu0 0.0
        %797 = vmatprep.subr.mxu0 0.0
        %798 = vmatpush1.msra.mxu0 0.0
        %799 = vmatprep.subr.mxu0 0.0
        %800 = vmatpush1.msra.mxu0 0.0
        %801 = vmatprep.subr.mxu0 0.0
        %802 = vmatpush1.msra.mxu0 0.0
        %803 = vmatprep.subr.mxu0 0.0
        %804 = vmatpush1.msra.mxu0 0.0
        %805 = vmatprep.subr.mxu0 0.0
        %806 = vmatpush1.msra.mxu0 0.0
        %807 = vmatprep.subr.mxu0 0.0
        %808 = vmatpush1.msra.mxu0 0.0
        %809 = vmatprep.subr.mxu0 0.0
        %810 = vmatpush1.msra.mxu0 0.0
        %811 = vmatprep.subr.mxu0 0.0
        %812 = vmatpush1.msra.mxu0 0.0
        %813 = vmatprep.subr.mxu0 0.0
        %814 = vmatpush1.msra.mxu0 0.0
        %815 = vmatprep.subr.mxu0 0.0
        %816 = vmatpush1.msra.mxu0 0.0
        %817 = vmatprep.subr.mxu0 0.0
        %818 = vmatpush1.msra.mxu0 %v373
        %819 = vmatprep.subr.mxu0 0.0
        %820 = vmatpush2.msra.mxu0 0.0
        %821 = vmatprep.subr.mxu0 0.0
        %822 = vmatpush2.msra.mxu0 0.0
        %823 = vmatprep.subr.mxu0 0.0
        %824 = vmatpush2.msra.mxu0 0.0
        %825 = vmatprep.subr.mxu0 0.0
        %826 = vmatpush2.msra.mxu0 0.0
        %827 = vmatprep.subr.mxu0 0.0
        %828 = vmatpush2.msra.mxu0 0.0
        %829 = vmatprep.subr.mxu0 0.0
        %830 = vmatpush2.msra.mxu0 0.0
        %831 = vmatprep.subr.mxu0 0.0
        %832 = vmatpush2.msra.mxu0 0.0
        %833 = vmatprep.subr.mxu0 0.0
        %834 = vmatpush2.msra.mxu0 0.0
        %835 = vmatprep.subr.mxu0 0.0
        %836 = vmatpush2.msra.mxu0 0.0
        %837 = vmatprep.subr.mxu0 0.0
        %838 = vmatpush2.msra.mxu0 0.0
        %839 = vmatprep.subr.mxu0 0.0
        %840 = vmatpush2.msra.mxu0 0.0
        %841 = vmatprep.subr.mxu0 0.0
        %842 = vmatpush2.msra.mxu0 0.0
        %843 = vmatprep.subr.mxu0 0.0
        %844 = vmatpush2.msra.mxu0 0.0
        %845 = vmatprep.subr.mxu0 0.0
        %846 = vmatpush2.msra.mxu0 0.0
        %847 = vmatprep.subr.mxu0 0.0
        %848 = vmatpush2.msra.mxu0 0.0
        %849 = vmatprep.subr.mxu0 0.0
        %850 = vmatpush2.msra.mxu0 0.0
        %851 = vmatprep.mubr.f32.mxu0 0.0
        %852 = vmatmul.mubr.f32.gmra.mxu0 %v785
        %v853 = vpop.f32.mrf.mxu0
        %v854 = vadd.f32 0.0, %v853
        %v855 = vpop.f32.mrf.mxu0
        %856 = vdwg.mxu0
        %v858 = vsel %vm378, %v750, 0
        %860 = vmatprep.subr.mxu0 0.0
        %861 = vmatpush1.msra.mxu0 0.0
        %862 = vmatprep.subr.mxu0 0.0
        %863 = vmatpush1.msra.mxu0 0.0
        %864 = vmatprep.subr.mxu0 0.0
        %865 = vmatpush1.msra.mxu0 0.0
        %866 = vmatprep.subr.mxu0 0.0
        %867 = vmatpush1.msra.mxu0 0.0
        %868 = vmatprep.subr.mxu0 0.0
        %869 = vmatpush1.msra.mxu0 0.0
        %870 = vmatprep.subr.mxu0 0.0
        %871 = vmatpush1.msra.mxu0 0.0
        %872 = vmatprep.subr.mxu0 0.0
        %873 = vmatpush1.msra.mxu0 0.0
        %874 = vmatprep.subr.mxu0 0.0
        %875 = vmatpush1.msra.mxu0 0.0
        %876 = vmatprep.subr.mxu0 0.0
        %877 = vmatpush1.msra.mxu0 0.0
        %878 = vmatprep.subr.mxu0 0.0
        %879 = vmatpush1.msra.mxu0 0.0
        %880 = vmatprep.subr.mxu0 0.0
        %881 = vmatpush1.msra.mxu0 0.0
        %882 = vmatprep.subr.mxu0 0.0
        %883 = vmatpush1.msra.mxu0 0.0
        %884 = vmatprep.subr.mxu0 0.0
        %885 = vmatpush1.msra.mxu0 0.0
        %886 = vmatprep.subr.mxu0 0.0
        %887 = vmatpush1.msra.mxu0 0.0
        %888 = vmatprep.subr.mxu0 0.0
        %889 = vmatpush1.msra.mxu0 0.0
        %890 = vmatprep.subr.mxu0 0.0
        %891 = vmatpush1.msra.mxu0 %v374
        %892 = vmatprep.subr.mxu0 0.0
        %893 = vmatpush2.msra.mxu0 0.0
        %894 = vmatprep.subr.mxu0 0.0
        %895 = vmatpush2.msra.mxu0 0.0
        %896 = vmatprep.subr.mxu0 0.0
        %897 = vmatpush2.msra.mxu0 0.0
        %898 = vmatprep.subr.mxu0 0.0
        %899 = vmatpush2.msra.mxu0 0.0
        %900 = vmatprep.subr.mxu0 0.0
        %901 = vmatpush2.msra.mxu0 0.0
        %902 = vmatprep.subr.mxu0 0.0
        %903 = vmatpush2.msra.mxu0 0.0
        %904 = vmatprep.subr.mxu0 0.0
        %905 = vmatpush2.msra.mxu0 0.0
        %906 = vmatprep.subr.mxu0 0.0
        %907 = vmatpush2.msra.mxu0 0.0
        %908 = vmatprep.subr.mxu0 0.0
        %909 = vmatpush2.msra.mxu0 0.0
        %910 = vmatprep.subr.mxu0 0.0
        %911 = vmatpush2.msra.mxu0 0.0
        %912 = vmatprep.subr.mxu0 0.0
        %913 = vmatpush2.msra.mxu0 0.0
        %914 = vmatprep.subr.mxu0 0.0
        %915 = vmatpush2.msra.mxu0 0.0
        %916 = vmatprep.subr.mxu0 0.0
        %917 = vmatpush2.msra.mxu0 0.0
        %918 = vmatprep.subr.mxu0 0.0
        %919 = vmatpush2.msra.mxu0 0.0
        %920 = vmatprep.subr.mxu0 0.0
        %921 = vmatpush2.msra.mxu0 0.0
        %922 = vmatprep.subr.mxu0 0.0
        %923 = vmatpush2.msra.mxu0 0.0
        %924 = vmatprep.mubr.f32.mxu0 0.0
        %925 = vmatmul.mubr.f32.gmra.mxu0 %v858
        %v926 = vpop.f32.mrf.mxu0
        %v927 = vadd.f32 0.0, %v926
        %v928 = vpop.f32.mrf.mxu0
        %929 = vdwg.mxu0
        %v931 = vsel %vm378, %v752, 0
        %933 = vmatprep.subr.mxu0 0.0
        %934 = vmatpush1.msra.mxu0 0.0
        %935 = vmatprep.subr.mxu0 0.0
        %936 = vmatpush1.msra.mxu0 0.0
        %937 = vmatprep.subr.mxu0 0.0
        %938 = vmatpush1.msra.mxu0 0.0
        %939 = vmatprep.subr.mxu0 0.0
        %940 = vmatpush1.msra.mxu0 0.0
        %941 = vmatprep.subr.mxu0 0.0
        %942 = vmatpush1.msra.mxu0 0.0
        %943 = vmatprep.subr.mxu0 0.0
        %944 = vmatpush1.msra.mxu0 0.0
        %945 = vmatprep.subr.mxu0 0.0
        %946 = vmatpush1.msra.mxu0 0.0
        %947 = vmatprep.subr.mxu0 0.0
        %948 = vmatpush1.msra.mxu0 0.0
        %949 = vmatprep.subr.mxu0 0.0
        %950 = vmatpush1.msra.mxu0 0.0
        %951 = vmatprep.subr.mxu0 0.0
        %952 = vmatpush1.msra.mxu0 0.0
        %953 = vmatprep.subr.mxu0 0.0
        %954 = vmatpush1.msra.mxu0 0.0
        %955 = vmatprep.subr.mxu0 0.0
        %956 = vmatpush1.msra.mxu0 0.0
        %957 = vmatprep.subr.mxu0 0.0
        %958 = vmatpush1.msra.mxu0 0.0
        %959 = vmatprep.subr.mxu0 0.0
        %960 = vmatpush1.msra.mxu0 0.0
        %961 = vmatprep.subr.mxu0 0.0
        %962 = vmatpush1.msra.mxu0 0.0
        %963 = vmatprep.subr.mxu0 0.0
        %964 = vmatpush1.msra.mxu0 %v375
        %965 = vmatprep.subr.mxu0 0.0
        %966 = vmatpush2.msra.mxu0 0.0
        %967 = vmatprep.subr.mxu0 0.0
        %968 = vmatpush2.msra.mxu0 0.0
        %969 = vmatprep.subr.mxu0 0.0
        %970 = vmatpush2.msra.mxu0 0.0
        %971 = vmatprep.subr.mxu0 0.0
        %972 = vmatpush2.msra.mxu0 0.0
        %973 = vmatprep.subr.mxu0 0.0
        %974 = vmatpush2.msra.mxu0 0.0
        %975 = vmatprep.subr.mxu0 0.0
        %976 = vmatpush2.msra.mxu0 0.0
        %977 = vmatprep.subr.mxu0 0.0
        %978 = vmatpush2.msra.mxu0 0.0
        %979 = vmatprep.subr.mxu0 0.0
        %980 = vmatpush2.msra.mxu0 0.0
        %981 = vmatprep.subr.mxu0 0.0
        %982 = vmatpush2.msra.mxu0 0.0
        %983 = vmatprep.subr.mxu0 0.0
        %984 = vmatpush2.msra.mxu0 0.0
        %985 = vmatprep.subr.mxu0 0.0
        %986 = vmatpush2.msra.mxu0 0.0
        %987 = vmatprep.subr.mxu0 0.0
        %988 = vmatpush2.msra.mxu0 0.0
        %989 = vmatprep.subr.mxu0 0.0
        %990 = vmatpush2.msra.mxu0 0.0
        %991 = vmatprep.subr.mxu0 0.0
        %992 = vmatpush2.msra.mxu0 0.0
        %993 = vmatprep.subr.mxu0 0.0
        %994 = vmatpush2.msra.mxu0 0.0
        %995 = vmatprep.subr.mxu0 0.0
        %996 = vmatpush2.msra.mxu0 0.0
        %997 = vmatprep.mubr.f32.mxu0 0.0
        %998 = vmatmul.mubr.f32.gmra.mxu0 %v931
        %v999 = vpop.f32.mrf.mxu0
        %v1000 = vadd.f32 0.0, %v999
        %v1001 = vpop.f32.mrf.mxu0
        %1002 = vdwg.mxu0
        %v1004 = vsel %vm378, %v754, 0
        %1006 = vmatprep.subr.mxu0 0.0
        %1007 = vmatpush1.msra.mxu0 0.0
        %1008 = vmatprep.subr.mxu0 0.0
        %1009 = vmatpush1.msra.mxu0 0.0
        %1010 = vmatprep.subr.mxu0 0.0
        %1011 = vmatpush1.msra.mxu0 0.0
        %1012 = vmatprep.subr.mxu0 0.0
        %1013 = vmatpush1.msra.mxu0 0.0
        %1014 = vmatprep.subr.mxu0 0.0
        %1015 = vmatpush1.msra.mxu0 0.0
        %1016 = vmatprep.subr.mxu0 0.0
        %1017 = vmatpush1.msra.mxu0 0.0
        %1018 = vmatprep.subr.mxu0 0.0
        %1019 = vmatpush1.msra.mxu0 0.0
        %1020 = vmatprep.subr.mxu0 0.0
        %1021 = vmatpush1.msra.mxu0 0.0
        %1022 = vmatprep.subr.mxu0 0.0
        %1023 = vmatpush1.msra.mxu0 0.0
        %1024 = vmatprep.subr.mxu0 0.0
        %1025 = vmatpush1.msra.mxu0 0.0
        %1026 = vmatprep.subr.mxu0 0.0
        %1027 = vmatpush1.msra.mxu0 0.0
        %1028 = vmatprep.subr.mxu0 0.0
        %1029 = vmatpush1.msra.mxu0 0.0
        %1030 = vmatprep.subr.mxu0 0.0
        %1031 = vmatpush1.msra.mxu0 0.0
        %1032 = vmatprep.subr.mxu0 0.0
        %1033 = vmatpush1.msra.mxu0 0.0
        %1034 = vmatprep.subr.mxu0 0.0
        %1035 = vmatpush1.msra.mxu0 0.0
        %1036 = vmatprep.subr.mxu0 0.0
        %1037 = vmatpush1.msra.mxu0 %v376
        %1038 = vmatprep.subr.mxu0 0.0
        %1039 = vmatpush2.msra.mxu0 0.0
        %1040 = vmatprep.subr.mxu0 0.0
        %1041 = vmatpush2.msra.mxu0 0.0
        %1042 = vmatprep.subr.mxu0 0.0
        %1043 = vmatpush2.msra.mxu0 0.0
        %1044 = vmatprep.subr.mxu0 0.0
        %1045 = vmatpush2.msra.mxu0 0.0
        %1046 = vmatprep.subr.mxu0 0.0
        %1047 = vmatpush2.msra.mxu0 0.0
        %1048 = vmatprep.subr.mxu0 0.0
        %1049 = vmatpush2.msra.mxu0 0.0
        %1050 = vmatprep.subr.mxu0 0.0
        %1051 = vmatpush2.msra.mxu0 0.0
        %1052 = vmatprep.subr.mxu0 0.0
        %1053 = vmatpush2.msra.mxu0 0.0
        %1054 = vmatprep.subr.mxu0 0.0
        %1055 = vmatpush2.msra.mxu0 0.0
        %1056 = vmatprep.subr.mxu0 0.0
        %1057 = vmatpush2.msra.mxu0 0.0
        %1058 = vmatprep.subr.mxu0 0.0
        %1059 = vmatpush2.msra.mxu0 0.0
        %1060 = vmatprep.subr.mxu0 0.0
        %1061 = vmatpush2.msra.mxu0 0.0
        %1062 = vmatprep.subr.mxu0 0.0
        %1063 = vmatpush2.msra.mxu0 0.0
        %1064 = vmatprep.subr.mxu0 0.0
        %1065 = vmatpush2.msra.mxu0 0.0
        %1066 = vmatprep.subr.mxu0 0.0
        %1067 = vmatpush2.msra.mxu0 0.0
        %1068 = vmatprep.subr.mxu0 0.0
        %1069 = vmatpush2.msra.mxu0 0.0
        %1070 = vmatprep.mubr.f32.mxu0 0.0
        %1071 = vmatmul.mubr.f32.gmra.mxu0 %v1004
        %v1072 = vpop.f32.mrf.mxu0
        %v1073 = vadd.f32 0.0, %v1072
        %v1074 = vpop.f32.mrf.mxu0
        %1075 = vdwg.mxu0
        %v1076 = vld [vmem:[#allocation4] sm:$0xff]
        %v1077 = vld [vmem:[#allocation4 + $0x8] sm:$0xff]
        %v1078 = vld [vmem:[#allocation4 + $0x10] sm:$0xff]
        %v1079 = vld [vmem:[#allocation4 + $0x18] sm:$0xff]
        %1081 = vset.pattern.permute.xlu0 0
        %1082 = vperm.xlu0 %1081, %v716
        %v1083 = vpop.permute.xlu0 %1082
        %1086 = vset.pattern.permute.xlu0 0
        %1087 = vperm.xlu0 %1086, %v718
        %v1088 = vpop.permute.xlu0 %1087
        %1091 = vset.pattern.permute.xlu0 0
        %1092 = vperm.xlu0 %1091, %v720
        %v1093 = vpop.permute.xlu0 %1092
        %1096 = vset.pattern.permute.xlu0 0
        %1097 = vperm.xlu0 %1096, %v722
        %v1098 = vpop.permute.xlu0 %1097
        %v1100 = vmul.f32 %v1083, %v1076
        %v1101 = vmul.f32 %v1088, %v1077
        %v1102 = vmul.f32 %v1093, %v1078
        %v1103 = vmul.f32 %v1098, %v1079
        %v1104 = vadd.f32 %v1100, %v854
        %v1105 = vadd.f32 %v1101, %v927
        %v1106 = vadd.f32 %v1102, %v1000
        %v1107 = vadd.f32 %v1103, %v1073
        %1108 = vst.msk [vmem:[#allocation4] sm:$0xff] %vm378, %v1104
        %1109 = vst.msk [vmem:[#allocation4 + $0x8] sm:$0xff] %vm378, %v1105
        %1110 = vst.msk [vmem:[#allocation4 + $0x10] sm:$0xff] %vm378, %v1106
        %1111 = vst.msk [vmem:[#allocation4 + $0x18] sm:$0xff] %vm378, %v1107
        %1112 = vst.msk [vmem:[#allocation2] sm:$0xff] %vm779, %v707
        %1113 = vst.msk [vmem:[#allocation2 + $0x8] sm:$0xff] %vm779, %v708
        %1114 = vst.msk [vmem:[#allocation2 + $0x10] sm:$0xff] %vm779, %v709
        %1115 = vst.msk [vmem:[#allocation2 + $0x18] sm:$0xff] %vm779, %v710
        // Predicated region
        $region57: #{tpu_custom_call.1} parent=35 // pred_check
          %p1116 = pneg %p347
        $region58: #{tpu_custom_call.1} parent=35 // pred_check_branch
          %1118 = sbr.rel (%p1116) target = $region60
        $region59: #{tpu_custom_call.1} parent=35 // pred_region
          %v1119 = vld [vmem:[#allocation3] sm:$0xff]
          %v1120 = vld [vmem:[#allocation3 + $0x8] sm:$0xff]
          %v1121 = vld [vmem:[#allocation3 + $0x10] sm:$0xff]
          %v1122 = vld [vmem:[#allocation3 + $0x18] sm:$0xff]
          %v1123 = vrcp.pop %v1119
          %v1124 = vrcp.pop %v1120
          %v1125 = vrcp.pop %v1121
          %v1126 = vrcp.pop %v1122
          %v1127 = vld [vmem:[#allocation4] sm:$0xff]
          %1129 = vset.pattern.permute.xlu0 0
          %1130 = vperm.xlu0 %1129, %v1123
          %v1131 = vpop.permute.xlu0 %1130
          %v1133 = vmul.f32 %v1127, %v1131
          %v1135 = vcombine.high %v1133, %v1133
          %v1137 = vunpack.c.l.s4 1966171168
          %v1138 = vunpack.c.0.s8 %v1137
          %v1139 = vlaneseq
          %v1140 = vshrl.u32 %v1139, 7
          %v1141 = vsub.s32 %v1138, %v1140
          %v1142 = vrot.slane %v1133, %v1141
          %v1144 = vunpack.c.l.s4 1966171168
          %v1145 = vunpack.c.0.s8 %v1144
          %v1146 = vlaneseq
          %v1147 = vshrl.u32 %v1146, 7
          %v1148 = vsub.s32 %v1145, %v1147
          %v1149 = vrot.slane %v1135, %v1148
          %v1150 = vcombine.high %v1142, %v1142
          %v1151 = vcombine.high %v1149, %v1149
          %v1153 = vunpack.c.l.s4 1966171168
          %v1154 = vunpack.c.0.s8 %v1153
          %v1155 = vlaneseq
          %v1156 = vshrl.u32 %v1155, 7
          %v1157 = vsub.s32 %v1154, %v1156
          %v1158 = vrot.slane %v1142, %v1157
          %v1160 = vunpack.c.l.s4 1966171168
          %v1161 = vunpack.c.0.s8 %v1160
          %v1162 = vlaneseq
          %v1163 = vshrl.u32 %v1162, 7
          %v1164 = vsub.s32 %v1161, %v1163
          %v1165 = vrot.slane %v1149, %v1164
          %v1167 = vunpack.c.l.s4 1966171168
          %v1168 = vunpack.c.0.s8 %v1167
          %v1169 = vlaneseq
          %v1170 = vshrl.u32 %v1169, 7
          %v1171 = vsub.s32 %v1168, %v1170
          %v1172 = vrot.slane %v1150, %v1171
          %v1174 = vunpack.c.l.s4 1966171168
          %v1175 = vunpack.c.0.s8 %v1174
          %v1176 = vlaneseq
          %v1177 = vshrl.u32 %v1176, 7
          %v1178 = vsub.s32 %v1175, %v1177
          %v1179 = vrot.slane %v1151, %v1178
          %v1180 = vcombine.high %v1158, %v1158
          %v1181 = vcombine.high %v1165, %v1165
          %v1182 = vcombine.high %v1172, %v1172
          %v1183 = vcombine.high %v1179, %v1179
          %vm1192 = vcmask 57344
          %1193 = vst.msk [vmem:[%s345] sm:$0x1] %vm1192, %v1158
          %1194 = vst.msk [vmem:[%s345 + $0x4] sm:$0x1] %vm1192, %v1172
          %1195 = vst.msk [vmem:[%s345 + $0x8] sm:$0x1] %vm1192, %v1180
          %1196 = vst.msk [vmem:[%s345 + $0xc] sm:$0x1] %vm1192, %v1182
          %1197 = vst.msk [vmem:[%s345 + $0x10] sm:$0x1] %vm1192, %v1165
          %1198 = vst.msk [vmem:[%s345 + $0x14] sm:$0x1] %vm1192, %v1179
          %1199 = vst.msk [vmem:[%s345 + $0x18] sm:$0x1] %vm1192, %v1181
          %1200 = vst.msk [vmem:[%s345 + $0x1c] sm:$0x1] %vm1192, %v1183
          %s1201 = scalar_lea.vmem [#allocation4], 8
          %v1202 = vld [vmem:[%s1201] sm:$0xff]
          %1204 = vset.pattern.permute.xlu0 0
          %1205 = vperm.xlu0 %1204, %v1124
          %v1206 = vpop.permute.xlu0 %1205
          %v1208 = vmul.f32 %v1202, %v1206
          %v1210 = vcombine.high %v1208, %v1208
          %v1212 = vunpack.c.l.s4 1966171168
          %v1213 = vunpack.c.0.s8 %v1212
          %v1214 = vlaneseq
          %v1215 = vshrl.u32 %v1214, 7
          %v1216 = vsub.s32 %v1213, %v1215
          %v1217 = vrot.slane %v1208, %v1216
          %v1219 = vunpack.c.l.s4 1966171168
          %v1220 = vunpack.c.0.s8 %v1219
          %v1221 = vlaneseq
          %v1222 = vshrl.u32 %v1221, 7
          %v1223 = vsub.s32 %v1220, %v1222
          %v1224 = vrot.slane %v1210, %v1223
          %v1225 = vcombine.high %v1217, %v1217
          %v1226 = vcombine.high %v1224, %v1224
          %v1228 = vunpack.c.l.s4 1966171168
          %v1229 = vunpack.c.0.s8 %v1228
          %v1230 = vlaneseq
          %v1231 = vshrl.u32 %v1230, 7
          %v1232 = vsub.s32 %v1229, %v1231
          %v1233 = vrot.slane %v1217, %v1232
          %v1235 = vunpack.c.l.s4 1966171168
          %v1236 = vunpack.c.0.s8 %v1235
          %v1237 = vlaneseq
          %v1238 = vshrl.u32 %v1237, 7
          %v1239 = vsub.s32 %v1236, %v1238
          %v1240 = vrot.slane %v1224, %v1239
          %v1242 = vunpack.c.l.s4 1966171168
          %v1243 = vunpack.c.0.s8 %v1242
          %v1244 = vlaneseq
          %v1245 = vshrl.u32 %v1244, 7
          %v1246 = vsub.s32 %v1243, %v1245
          %v1247 = vrot.slane %v1225, %v1246
          %v1249 = vunpack.c.l.s4 1966171168
          %v1250 = vunpack.c.0.s8 %v1249
          %v1251 = vlaneseq
          %v1252 = vshrl.u32 %v1251, 7
          %v1253 = vsub.s32 %v1250, %v1252
          %v1254 = vrot.slane %v1226, %v1253
          %v1255 = vcombine.high %v1233, %v1233
          %v1256 = vcombine.high %v1240, %v1240
          %v1257 = vcombine.high %v1247, %v1247
          %v1258 = vcombine.high %v1254, %v1254
          %1267 = vst.msk [vmem:[%s345 + $0x1] sm:$0x1] %vm1192, %v1233
          %1268 = vst.msk [vmem:[%s345 + $0x5] sm:$0x1] %vm1192, %v1247
          %1269 = vst.msk [vmem:[%s345 + $0x9] sm:$0x1] %vm1192, %v1255
          %1270 = vst.msk [vmem:[%s345 + $0xd] sm:$0x1] %vm1192, %v1257
          %1271 = vst.msk [vmem:[%s345 + $0x11] sm:$0x1] %vm1192, %v1240
          %1272 = vst.msk [vmem:[%s345 + $0x15] sm:$0x1] %vm1192, %v1254
          %1273 = vst.msk [vmem:[%s345 + $0x19] sm:$0x1] %vm1192, %v1256
          %1274 = vst.msk [vmem:[%s345 + $0x1d] sm:$0x1] %vm1192, %v1258
          %s1275 = scalar_lea.vmem [#allocation4], 16
          %v1276 = vld [vmem:[%s1275] sm:$0xff]
          %1278 = vset.pattern.permute.xlu0 0
          %1279 = vperm.xlu0 %1278, %v1125
          %v1280 = vpop.permute.xlu0 %1279
          %v1282 = vmul.f32 %v1276, %v1280
          %v1284 = vcombine.high %v1282, %v1282
          %v1286 = vunpack.c.l.s4 1966171168
          %v1287 = vunpack.c.0.s8 %v1286
          %v1288 = vlaneseq
          %v1289 = vshrl.u32 %v1288, 7
          %v1290 = vsub.s32 %v1287, %v1289
          %v1291 = vrot.slane %v1282, %v1290
          %v1293 = vunpack.c.l.s4 1966171168
          %v1294 = vunpack.c.0.s8 %v1293
          %v1295 = vlaneseq
          %v1296 = vshrl.u32 %v1295, 7
          %v1297 = vsub.s32 %v1294, %v1296
          %v1298 = vrot.slane %v1284, %v1297
          %v1299 = vcombine.high %v1291, %v1291
          %v1300 = vcombine.high %v1298, %v1298
          %v1302 = vunpack.c.l.s4 1966171168
          %v1303 = vunpack.c.0.s8 %v1302
          %v1304 = vlaneseq
          %v1305 = vshrl.u32 %v1304, 7
          %v1306 = vsub.s32 %v1303, %v1305
          %v1307 = vrot.slane %v1291, %v1306
          %v1309 = vunpack.c.l.s4 1966171168
          %v1310 = vunpack.c.0.s8 %v1309
          %v1311 = vlaneseq
          %v1312 = vshrl.u32 %v1311, 7
          %v1313 = vsub.s32 %v1310, %v1312
          %v1314 = vrot.slane %v1298, %v1313
          %v1316 = vunpack.c.l.s4 1966171168
          %v1317 = vunpack.c.0.s8 %v1316
          %v1318 = vlaneseq
          %v1319 = vshrl.u32 %v1318, 7
          %v1320 = vsub.s32 %v1317, %v1319
          %v1321 = vrot.slane %v1299, %v1320
          %v1323 = vunpack.c.l.s4 1966171168
          %v1324 = vunpack.c.0.s8 %v1323
          %v1325 = vlaneseq
          %v1326 = vshrl.u32 %v1325, 7
          %v1327 = vsub.s32 %v1324, %v1326
          %v1328 = vrot.slane %v1300, %v1327
          %v1329 = vcombine.high %v1307, %v1307
          %v1330 = vcombine.high %v1314, %v1314
          %v1331 = vcombine.high %v1321, %v1321
          %v1332 = vcombine.high %v1328, %v1328
          %1341 = vst.msk [vmem:[%s345 + $0x2] sm:$0x1] %vm1192, %v1307
          %1342 = vst.msk [vmem:[%s345 + $0x6] sm:$0x1] %vm1192, %v1321
          %1343 = vst.msk [vmem:[%s345 + $0xa] sm:$0x1] %vm1192, %v1329
          %1344 = vst.msk [vmem:[%s345 + $0xe] sm:$0x1] %vm1192, %v1331
          %1345 = vst.msk [vmem:[%s345 + $0x12] sm:$0x1] %vm1192, %v1314
          %1346 = vst.msk [vmem:[%s345 + $0x16] sm:$0x1] %vm1192, %v1328
          %1347 = vst.msk [vmem:[%s345 + $0x1a] sm:$0x1] %vm1192, %v1330
          %1348 = vst.msk [vmem:[%s345 + $0x1e] sm:$0x1] %vm1192, %v1332
          %s1349 = scalar_lea.vmem [#allocation4], 24
          %v1350 = vld [vmem:[%s1349] sm:$0xff]
          %1352 = vset.pattern.permute.xlu0 0
          %1353 = vperm.xlu0 %1352, %v1126
          %v1354 = vpop.permute.xlu0 %1353
          %v1356 = vmul.f32 %v1350, %v1354
          %v1358 = vcombine.high %v1356, %v1356
          %v1360 = vunpack.c.l.s4 1966171168
          %v1361 = vunpack.c.0.s8 %v1360
          %v1362 = vlaneseq
          %v1363 = vshrl.u32 %v1362, 7
          %v1364 = vsub.s32 %v1361, %v1363
          %v1365 = vrot.slane %v1356, %v1364
          %v1367 = vunpack.c.l.s4 1966171168
          %v1368 = vunpack.c.0.s8 %v1367
          %v1369 = vlaneseq
          %v1370 = vshrl.u32 %v1369, 7
          %v1371 = vsub.s32 %v1368, %v1370
          %v1372 = vrot.slane %v1358, %v1371
          %v1373 = vcombine.high %v1365, %v1365
          %v1374 = vcombine.high %v1372, %v1372
          %v1376 = vunpack.c.l.s4 1966171168
          %v1377 = vunpack.c.0.s8 %v1376
          %v1378 = vlaneseq
          %v1379 = vshrl.u32 %v1378, 7
          %v1380 = vsub.s32 %v1377, %v1379
          %v1381 = vrot.slane %v1365, %v1380
          %v1383 = vunpack.c.l.s4 1966171168
          %v1384 = vunpack.c.0.s8 %v1383
          %v1385 = vlaneseq
          %v1386 = vshrl.u32 %v1385, 7
          %v1387 = vsub.s32 %v1384, %v1386
          %v1388 = vrot.slane %v1372, %v1387
          %v1390 = vunpack.c.l.s4 1966171168
          %v1391 = vunpack.c.0.s8 %v1390
          %v1392 = vlaneseq
          %v1393 = vshrl.u32 %v1392, 7
          %v1394 = vsub.s32 %v1391, %v1393
          %v1395 = vrot.slane %v1373, %v1394
          %v1397 = vunpack.c.l.s4 1966171168
          %v1398 = vunpack.c.0.s8 %v1397
          %v1399 = vlaneseq
          %v1400 = vshrl.u32 %v1399, 7
          %v1401 = vsub.s32 %v1398, %v1400
          %v1402 = vrot.slane %v1374, %v1401
          %v1403 = vcombine.high %v1381, %v1381
          %v1404 = vcombine.high %v1388, %v1388
          %v1405 = vcombine.high %v1395, %v1395
          %v1406 = vcombine.high %v1402, %v1402
          %1415 = vst.msk [vmem:[%s345 + $0x3] sm:$0x1] %vm1192, %v1381
          %1416 = vst.msk [vmem:[%s345 + $0x7] sm:$0x1] %vm1192, %v1395
          %1417 = vst.msk [vmem:[%s345 + $0xb] sm:$0x1] %vm1192, %v1403
          %1418 = vst.msk [vmem:[%s345 + $0xf] sm:$0x1] %vm1192, %v1405
          %1419 = vst.msk [vmem:[%s345 + $0x13] sm:$0x1] %vm1192, %v1388
          %1420 = vst.msk [vmem:[%s345 + $0x17] sm:$0x1] %vm1192, %v1402
          %1421 = vst.msk [vmem:[%s345 + $0x1b] sm:$0x1] %vm1192, %v1404
          %1422 = vst.msk [vmem:[%s345 + $0x1f] sm:$0x1] %vm1192, %v1406
        $region60: #{tpu_custom_call.1} parent=35 // pred_fallthru
          _
        %s1423 = sand.u32 %s166, 1
        %s1424 = scalar_lea.sflag [#allocation7], %s1423
        %s1425 = sand.u32 %s166, 1
        %s1426 = smul.addr %s1425, 32
        %s1427 = scalar_lea.vmem [#allocation13], %s1426
        // Predicated region
        $region61: #{tpu_custom_call.1} parent=35 // pred_check
          %p1428 = pneg %p176
        $region62: #{tpu_custom_call.1} parent=35 // pred_check_branch
          %1430 = sbr.rel (%p1428) target = $region64
        $region63: #{tpu_custom_call.1} parent=35 // pred_region
          %s1431 = smul.u32 8, %s31
          %s1433 = ssub.s32 512, 512
          %1434 = vsyncadd %s1424, %s1433
          %s1435 = smul.addr %s30, 8
          %s1436 = sadd.s32 %s1431, %s1435
          %s1437 = smul.addr %s1436, 64
          %s1438 = scalar_lea.hbm %s4, %s1437
          %s1439 = sshll.u32 %s1427, 4
          %s1440 = int_to_ptr.vmem [resolvable:$true] %s1439
          %1445 = dma.vmem_to_hbm [thread:$0]  %s1440, 512, %s1438, %s1424, 64, 64, 4
        $region64: #{tpu_custom_call.1} parent=35 // pred_fallthru
          _
      $region36: #{tpu_custom_call.1} parent=5 // pred_fallthru
        _
      %p1446 = scmp.le.s32.totalorder 2, %s20
      // Predicated region
      $region65: #{tpu_custom_call.1} parent=5 // pred_check
        %p1447 = pneg %p1446
      $region66: #{tpu_custom_call.1} parent=5 // pred_check_branch
        %1449 = sbr.rel (%p1447) target = $region68
      $region67: #{tpu_custom_call.1} parent=5 // pred_region
        %s1450 = ssub.s32 %s20, 2
        // Predicated region
        $region69: #{tpu_custom_call.1} parent=67 // pred_check
          %p1451 = pneg %p182
        $region70: #{tpu_custom_call.1} parent=67 // pred_check_branch
          %1453 = sbr.rel (%p1451) target = $region72
        $region71: #{tpu_custom_call.1} parent=67 // pred_region
          %s1454 = sand.u32 %s167, 1
          %s1455 = scalar_lea.sflag [#allocation7], %s1454
          %s1456 = sand.u32 %s167, 1
          %s1457 = smul.addr %s1456, 32
          %s1458 = scalar_lea.vmem [#allocation13], %s1457
          %1459 = dma.done %s1455, 512
        $region72: #{tpu_custom_call.1} parent=67 // pred_fallthru
          _
      $region68: #{tpu_custom_call.1} parent=5 // pred_fallthru
        _
    $region6: #{tpu_custom_call.1} parent=1 // loop_footer
      %s24 = sadd.s32 1, %s20
    $region7: #{tpu_custom_call.1} parent=1 // loop_footer_branch
      %19 = sbr.rel target = $region3
    $region8: #{tpu_custom_call.1} parent=1 // loop_exit
      _
    %1460 = vsyncpa [#allocation6], 1
    %s1461 = scalar_lea.sflag [#allocation6], 1
    %1462 = vsyncpa %s1461, 1
    %1463 = vsyncpa [#allocation9], 1
    %s1464 = scalar_lea.sflag [#allocation9], 1
    %1465 = vsyncpa %s1464, 1
    %1466 = vsyncpa [#allocation12], 1
    %1467 = vsyncpa [#allocation7], 1
    %s1468 = scalar_lea.sflag [#allocation7], 1
    %1469 = vsyncpa %s1468, 1

</llo_original>
